<compile_context>
chip_gen: v6e
topology: v6e:2x2x1
jax: 0.10.0
libtpu: 0.0.40
codegen_flags: <defaults>
</compile_context>

<pallas_src>
import functools

import numpy as np

import jax
import jax.numpy as jnp
from jax.experimental import pallas as pl
from jax.experimental.pallas import tpu as pltpu

EPS = 1e-5  # PyTorch InstanceNorm2d default


# ----------------------------------------------------------------------------
# Fused kernel: one grid step == one image, everything stays in VMEM.
# ----------------------------------------------------------------------------
def _resnet_block_kernel(x_ref, wb1_ref, wb2_ref, pool_ref, shift_ref,
                         gamma_ref, out_ref, *, H, W, C):
    WC = W * C
    inv_n = 1.0 / float(H * W)

    x = x_ref[0]                       # (H, W*C) f32, lane-dense load
    pool = pool_ref[...]               # (W*C, W*C): eye(C) blocks -> per-channel pooling
    s_prev = shift_ref[0]              # (H, H): row r -> row r-1 (reflected at r=0)
    s_next = shift_ref[1]              # (H, H): row r -> row r+1 (reflected at r=H-1)
    gamma = gamma_ref[0]               # scalar from SMEM

    def conv3x3_in(t, wb_ref):
        # 3x3 conv with ReflectionPad2d(1), as three lane-dense
        # (H, W*C) x (W*C, W*C) MXU matmuls against block-Toeplitz weights,
        # followed by affine-free InstanceNorm (single-pass statistics).
        prev = jnp.dot(s_prev, t, preferred_element_type=jnp.float32)
        nxt = jnp.dot(s_next, t, preferred_element_type=jnp.float32)
        y = jnp.dot(prev, wb_ref[0], preferred_element_type=jnp.float32)
        y = y + jnp.dot(t, wb_ref[1], preferred_element_type=jnp.float32)
        y = y + jnp.dot(nxt, wb_ref[2], preferred_element_type=jnp.float32)

        # Per-channel mean / E[y^2], replicated across the W lane-blocks so the
        # normalization stays in the dense (H, W*C) layout.
        yp = jnp.dot(y, pool, preferred_element_type=jnp.float32)
        yp2 = jnp.dot(y * y, pool, preferred_element_type=jnp.float32)
        mean = jnp.sum(yp, axis=0, keepdims=True) * inv_n        # (1, W*C)
        ex2 = jnp.sum(yp2, axis=0, keepdims=True) * inv_n
        var = jnp.maximum(ex2 - mean * mean, 0.0)
        return (y - mean) * jax.lax.rsqrt(var + EPS)

    h = jnp.maximum(conv3x3_in(x, wb1_ref), 0.0)   # conv1 -> IN -> ReLU (VMEM only)
    cb = conv3x3_in(h, wb2_ref)                    # conv2 -> IN
    # out = self_attention(x) + conv_block(x) + x = conv_block(x) + 2*x + gamma
    out_ref[0] = (cb + 2.0 * x + gamma).astype(out_ref.dtype)


# ----------------------------------------------------------------------------
# Host-side (one-time) preparation of kernel-ready parameters.
# ----------------------------------------------------------------------------
def _build_dense_conv_weights(w_hwio, width):
    """(3,3,C,C) HWIO weights -> (3, W*C, W*C) block-Toeplitz matrices.

    Wb[dy][pin*C+ci, pout*C+co] = sum over dx with reflect(pout+dx-1)==pin of
    w[dy, dx, ci, co].  This folds the dx taps, the W-edge reflection and the
    channel mixing into one lane-dense matmul operand.
    """
    w = np.asarray(w_hwio, dtype=np.float32)
    C = w.shape[2]
    wb = np.zeros((3, width * C, width * C), np.float32)
    for dy in range(3):
        for dx in range(3):
            for pout in range(width):
                pin = pout + dx - 1
                if pin < 0:
                    pin = 1                      # ReflectionPad2d(1): col -1 -> col 1
                elif pin > width - 1:
                    pin = width - 2              # col W -> col W-2
                wb[dy, pin * C:(pin + 1) * C, pout * C:(pout + 1) * C] += w[dy, dx]
    return jnp.asarray(wb)


def _build_row_shift(H):
    """0/1 matrices realizing row r-1 / r+1 with ReflectionPad2d(1) at H edges."""
    sp = np.zeros((H, H), np.float32)
    sn = np.zeros((H, H), np.float32)
    for r in range(H):
        sp[r, 1 if r == 0 else r - 1] = 1.0
        sn[r, H - 2 if r == H - 1 else r + 1] = 1.0
    return jnp.asarray(np.stack([sp, sn]))


def prepare_kernel_params(params, H, W):
    C = params["w1"].shape[2]
    return {
        "wb1": _build_dense_conv_weights(params["w1"], W),
        "wb2": _build_dense_conv_weights(params["w2"], W),
        "pool": jnp.asarray(np.tile(np.eye(C, dtype=np.float32), (W, W))),
        "shift": _build_row_shift(H),
        "gamma": params["gamma"].astype(jnp.float32),
        # b1/b2 intentionally omitted: a conv bias feeding an affine-free
        # InstanceNorm is exactly cancelled by the mean subtraction.
    }


# ----------------------------------------------------------------------------
# Public wrapper: NCHW in / NCHW out (PyTorch convention).
# ----------------------------------------------------------------------------
def resnet_block_forward(x_nchw, kparams):
    B, C, H, W = x_nchw.shape
    WC = W * C
    # NHWC, then merge W and C onto the lane axis (layout plumbing only).
    x = jnp.transpose(x_nchw, (0, 2, 3, 1)).reshape(B, H, WC)

    kern = functools.partial(_resnet_block_kernel, H=H, W=W, C=C)
    out = pl.pallas_call(
        kern,
        out_shape=jax.ShapeDtypeStruct((B, H, WC), x.dtype),
        grid=(B,),
        in_specs=[
            pl.BlockSpec((1, H, WC), lambda b: (b, 0, 0)),       # x (lane-dense)
            pl.BlockSpec((3, WC, WC), lambda b: (0, 0, 0)),      # conv1 Toeplitz
            pl.BlockSpec((3, WC, WC), lambda b: (0, 0, 0)),      # conv2 Toeplitz
            pl.BlockSpec((WC, WC), lambda b: (0, 0)),            # channel pooling
            pl.BlockSpec((2, H, H), lambda b: (0, 0, 0)),        # row-shift matrices
            pl.BlockSpec(memory_space=pltpu.MemorySpace.SMEM),   # gamma scalar
        ],
        out_specs=pl.BlockSpec((1, H, WC), lambda b: (b, 0, 0)),
        compiler_params=pltpu.CompilerParams(
            dimension_semantics=("parallel",)),
    )(x, kparams["wb1"], kparams["wb2"], kparams["pool"], kparams["shift"],
      kparams["gamma"])

    return jnp.transpose(out.reshape(B, H, W, C), (0, 3, 1, 2))


# ----------------------------------------------------------------------------
# Deterministic synthetic parameters (PyTorch layout) + pure-JAX reference.
# ----------------------------------------------------------------------------
def init_params(key, dim):
    k1, k2, k3, k4 = jax.random.split(key, 4)
    scale = 1.0 / (3.0 * 3.0 * dim) ** 0.5
    return {
        "w1": jax.random.uniform(k1, (3, 3, dim, dim), jnp.float32, -scale, scale),
        "b1": jax.random.uniform(k2, (1, dim), jnp.float32, -scale, scale),
        "w2": jax.random.uniform(k3, (3, 3, dim, dim), jnp.float32, -scale, scale),
        "b2": jax.random.uniform(k4, (1, dim), jnp.float32, -scale, scale),
        "gamma": jnp.zeros((1,), jnp.float32),  # Self_Attention.gamma
    }


def reference_forward(x_nchw, params):
    x = jnp.transpose(x_nchw, (0, 2, 3, 1))

    def conv(inp, w, b):
        xp = jnp.pad(inp, ((0, 0), (1, 1), (1, 1), (0, 0)), mode="reflect")
        y = jax.lax.conv_general_dilated(
            xp, w, (1, 1), "VALID",
            dimension_numbers=("NHWC", "HWIO", "NHWC"))
        return y + b.reshape(1, 1, 1, -1)

    def inorm(y):
        m = jnp.mean(y, axis=(1, 2), keepdims=True)
        v = jnp.mean((y - m) ** 2, axis=(1, 2), keepdims=True)
        return (y - m) / jnp.sqrt(v + EPS)

    h = jnp.maximum(inorm(conv(x, params["w1"], params["b1"])), 0.0)
    cb = inorm(conv(h, params["w2"], params["b2"]))
    out = cb + 2.0 * x + params["gamma"][0]
    return jnp.transpose(out, (0, 3, 1, 2))


if __name__ == "__main__":
    B, C, H, W = 2, 16, 16, 16  # dim=16 (divisible by 8, as Self_Attention implies)
    key = jax.random.PRNGKey(0)
    kx, kp = jax.random.split(key)
    x = jax.random.normal(kx, (B, C, H, W), jnp.float32)
    params = init_params(kp, C)
    kparams = prepare_kernel_params(params, H, W)

    out = jax.block_until_ready(resnet_block_forward(x, kparams))
    ref = jax.block_until_ready(reference_forward(x, params))

    assert out.shape == (B, C, H, W)
    assert jnp.allclose(out, ref, atol=2e-3, rtol=2e-3), float(
        jnp.max(jnp.abs(out - ref)))
    print("KERNEL_OK")
</pallas_src>

<mosaic_0001>
module attributes {stable_mosaic.version = 11 : i64} {
  func.func @_resnet_block_kernel(%arg0: i32, %arg1: memref<1x16x256xf32, #tpu.memory_space<vmem>>, %arg2: memref<3x256x256xf32, #tpu.memory_space<vmem>>, %arg3: memref<3x256x256xf32, #tpu.memory_space<vmem>>, %arg4: memref<256x256xf32, #tpu.memory_space<vmem>>, %arg5: memref<2x16x16xf32, #tpu.memory_space<vmem>>, %arg6: memref<1xf32, #tpu.memory_space<smem>>, %arg7: memref<1x16x256xf32, #tpu.memory_space<vmem>>) attributes {dimension_semantics = [#tpu.dimension_semantics<parallel>], iteration_bounds = array<i64: 2>, scalar_prefetch = 0 : i64, scratch_operands = 0 : i64, tpu.core_type = #tpu.core_type<tc>, window_params = [{transform_indices = @transform_0, window_bounds = array<i64: 1, 16, 256>}, {pipeline_mode = #tpu.pipeline_mode<synchronous>, transform_indices = @transform_1, window_bounds = array<i64: 3, 256, 256>}, {pipeline_mode = #tpu.pipeline_mode<synchronous>, transform_indices = @transform_2, window_bounds = array<i64: 3, 256, 256>}, {pipeline_mode = #tpu.pipeline_mode<synchronous>, transform_indices = @transform_3, window_bounds = array<i64: 256, 256>}, {pipeline_mode = #tpu.pipeline_mode<synchronous>, transform_indices = @transform_4, window_bounds = array<i64: 2, 16, 16>}, {transform_indices = @transform_5, window_bounds = array<i64: 1>}, {transform_indices = @transform_6, window_bounds = array<i64: 1, 16, 256>}]} {
    %c0 = arith.constant 0 : index
    %c0_0 = arith.constant 0 : index
    %c0_1 = arith.constant 0 : index
    %0 = vector.load %arg1[%c0, %c0_0, %c0_1] : memref<1x16x256xf32, #tpu.memory_space<vmem>>, vector<1x16x256xf32>
    %1 = vector.shape_cast %0 : vector<1x16x256xf32> to vector<16x256xf32>
    %c0_2 = arith.constant 0 : index
    %c0_3 = arith.constant 0 : index
    %2 = vector.load %arg4[%c0_2, %c0_3] : memref<256x256xf32, #tpu.memory_space<vmem>>, vector<256x256xf32>
    %c0_4 = arith.constant 0 : index
    %c0_5 = arith.constant 0 : index
    %c0_6 = arith.constant 0 : index
    %3 = vector.load %arg5[%c0_4, %c0_5, %c0_6] : memref<2x16x16xf32, #tpu.memory_space<vmem>>, vector<1x16x16xf32>
    %4 = vector.shape_cast %3 : vector<1x16x16xf32> to vector<16x16xf32>
    %c1 = arith.constant 1 : index
    %c0_7 = arith.constant 0 : index
    %c0_8 = arith.constant 0 : index
    %5 = vector.load %arg5[%c1, %c0_7, %c0_8] : memref<2x16x16xf32, #tpu.memory_space<vmem>>, vector<1x16x16xf32>
    %6 = vector.shape_cast %5 : vector<1x16x16xf32> to vector<16x16xf32>
    %c0_9 = arith.constant 0 : index
    %7 = memref.load %arg6[%c0_9] : memref<1xf32, #tpu.memory_space<smem>>
    %cst = arith.constant dense<0.000000e+00> : vector<16x256xf32>
    %8 = tpu.matmul %4, %1, %cst {dimension_numbers = #tpu.dot_dimension_numbers<[1], [0], [0], [1], [0, 0, 1, 1], [], []>} : vector<16x16xf32>, vector<16x256xf32>, vector<16x256xf32> -> vector<16x256xf32>
    %cst_10 = arith.constant dense<0.000000e+00> : vector<16x256xf32>
    %9 = tpu.matmul %6, %1, %cst_10 {dimension_numbers = #tpu.dot_dimension_numbers<[1], [0], [0], [1], [0, 0, 1, 1], [], []>} : vector<16x16xf32>, vector<16x256xf32>, vector<16x256xf32> -> vector<16x256xf32>
    %c0_11 = arith.constant 0 : index
    %c0_12 = arith.constant 0 : index
    %c0_13 = arith.constant 0 : index
    %10 = vector.load %arg2[%c0_11, %c0_12, %c0_13] : memref<3x256x256xf32, #tpu.memory_space<vmem>>, vector<1x256x256xf32>
    %11 = vector.shape_cast %10 : vector<1x256x256xf32> to vector<256x256xf32>
    %cst_14 = arith.constant dense<0.000000e+00> : vector<16x256xf32>
    %12 = tpu.matmul %8, %11, %cst_14 {dimension_numbers = #tpu.dot_dimension_numbers<[1], [0], [0], [1], [0, 0, 1, 1], [], []>} : vector<16x256xf32>, vector<256x256xf32>, vector<16x256xf32> -> vector<16x256xf32>
    %c1_15 = arith.constant 1 : index
    %c0_16 = arith.constant 0 : index
    %c0_17 = arith.constant 0 : index
    %13 = vector.load %arg2[%c1_15, %c0_16, %c0_17] : memref<3x256x256xf32, #tpu.memory_space<vmem>>, vector<1x256x256xf32>
    %14 = vector.shape_cast %13 : vector<1x256x256xf32> to vector<256x256xf32>
    %cst_18 = arith.constant dense<0.000000e+00> : vector<16x256xf32>
    %15 = tpu.matmul %1, %14, %cst_18 {dimension_numbers = #tpu.dot_dimension_numbers<[1], [0], [0], [1], [0, 0, 1, 1], [], []>} : vector<16x256xf32>, vector<256x256xf32>, vector<16x256xf32> -> vector<16x256xf32>
    %16 = arith.addf %12, %15 : vector<16x256xf32>
    %c2 = arith.constant 2 : index
    %c0_19 = arith.constant 0 : index
    %c0_20 = arith.constant 0 : index
    %17 = vector.load %arg2[%c2, %c0_19, %c0_20] : memref<3x256x256xf32, #tpu.memory_space<vmem>>, vector<1x256x256xf32>
    %18 = vector.shape_cast %17 : vector<1x256x256xf32> to vector<256x256xf32>
    %cst_21 = arith.constant dense<0.000000e+00> : vector<16x256xf32>
    %19 = tpu.matmul %9, %18, %cst_21 {dimension_numbers = #tpu.dot_dimension_numbers<[1], [0], [0], [1], [0, 0, 1, 1], [], []>} : vector<16x256xf32>, vector<256x256xf32>, vector<16x256xf32> -> vector<16x256xf32>
    %20 = arith.addf %16, %19 : vector<16x256xf32>
    %cst_22 = arith.constant dense<0.000000e+00> : vector<16x256xf32>
    %21 = tpu.matmul %20, %2, %cst_22 {dimension_numbers = #tpu.dot_dimension_numbers<[1], [0], [0], [1], [0, 0, 1, 1], [], []>} : vector<16x256xf32>, vector<256x256xf32>, vector<16x256xf32> -> vector<16x256xf32>
    %22 = arith.mulf %20, %20 : vector<16x256xf32>
    %cst_23 = arith.constant dense<0.000000e+00> : vector<16x256xf32>
    %23 = tpu.matmul %22, %2, %cst_23 {dimension_numbers = #tpu.dot_dimension_numbers<[1], [0], [0], [1], [0, 0, 1, 1], [], []>} : vector<16x256xf32>, vector<256x256xf32>, vector<16x256xf32> -> vector<16x256xf32>
    %cst_24 = arith.constant dense<0.000000e+00> : vector<256xf32>
    %24 = vector.multi_reduction <add>, %21, %cst_24 [0] : vector<16x256xf32> to vector<256xf32>
    %25 = vector.shape_cast %24 : vector<256xf32> to vector<1x256xf32>
    %cst_25 = arith.constant 3.906250e-03 : f32
    %26 = vector.broadcast %cst_25 : f32 to vector<1x256xf32>
    %27 = arith.mulf %25, %26 : vector<1x256xf32>
    %cst_26 = arith.constant dense<0.000000e+00> : vector<256xf32>
    %28 = vector.multi_reduction <add>, %23, %cst_26 [0] : vector<16x256xf32> to vector<256xf32>
    %29 = vector.shape_cast %28 : vector<256xf32> to vector<1x256xf32>
    %cst_27 = arith.constant 3.906250e-03 : f32
    %30 = vector.broadcast %cst_27 : f32 to vector<1x256xf32>
    %31 = arith.mulf %29, %30 : vector<1x256xf32>
    %32 = arith.mulf %27, %27 : vector<1x256xf32>
    %33 = arith.subf %31, %32 : vector<1x256xf32>
    %cst_28 = arith.constant 0.000000e+00 : f32
    %34 = vector.broadcast %cst_28 : f32 to vector<1x256xf32>
    %35 = arith.maximumf %33, %34 : vector<1x256xf32>
    %36 = vector.broadcast %27 : vector<1x256xf32> to vector<16x256xf32>
    %37 = arith.subf %20, %36 : vector<16x256xf32>
    %cst_29 = arith.constant 9.99999974E-6 : f32
    %38 = vector.broadcast %cst_29 : f32 to vector<1x256xf32>
    %39 = arith.addf %35, %38 : vector<1x256xf32>
    %40 = math.rsqrt %39 : vector<1x256xf32>
    %41 = vector.broadcast %40 : vector<1x256xf32> to vector<16x256xf32>
    %42 = arith.mulf %37, %41 : vector<16x256xf32>
    %cst_30 = arith.constant 0.000000e+00 : f32
    %43 = vector.broadcast %cst_30 : f32 to vector<16x256xf32>
    %44 = arith.maximumf %42, %43 : vector<16x256xf32>
    %cst_31 = arith.constant dense<0.000000e+00> : vector<16x256xf32>
    %45 = tpu.matmul %4, %44, %cst_31 {dimension_numbers = #tpu.dot_dimension_numbers<[1], [0], [0], [1], [0, 0, 1, 1], [], []>} : vector<16x16xf32>, vector<16x256xf32>, vector<16x256xf32> -> vector<16x256xf32>
    %cst_32 = arith.constant dense<0.000000e+00> : vector<16x256xf32>
    %46 = tpu.matmul %6, %44, %cst_32 {dimension_numbers = #tpu.dot_dimension_numbers<[1], [0], [0], [1], [0, 0, 1, 1], [], []>} : vector<16x16xf32>, vector<16x256xf32>, vector<16x256xf32> -> vector<16x256xf32>
    %c0_33 = arith.constant 0 : index
    %c0_34 = arith.constant 0 : index
    %c0_35 = arith.constant 0 : index
    %47 = vector.load %arg3[%c0_33, %c0_34, %c0_35] : memref<3x256x256xf32, #tpu.memory_space<vmem>>, vector<1x256x256xf32>
    %48 = vector.shape_cast %47 : vector<1x256x256xf32> to vector<256x256xf32>
    %cst_36 = arith.constant dense<0.000000e+00> : vector<16x256xf32>
    %49 = tpu.matmul %45, %48, %cst_36 {dimension_numbers = #tpu.dot_dimension_numbers<[1], [0], [0], [1], [0, 0, 1, 1], [], []>} : vector<16x256xf32>, vector<256x256xf32>, vector<16x256xf32> -> vector<16x256xf32>
    %c1_37 = arith.constant 1 : index
    %c0_38 = arith.constant 0 : index
    %c0_39 = arith.constant 0 : index
    %50 = vector.load %arg3[%c1_37, %c0_38, %c0_39] : memref<3x256x256xf32, #tpu.memory_space<vmem>>, vector<1x256x256xf32>
    %51 = vector.shape_cast %50 : vector<1x256x256xf32> to vector<256x256xf32>
    %cst_40 = arith.constant dense<0.000000e+00> : vector<16x256xf32>
    %52 = tpu.matmul %44, %51, %cst_40 {dimension_numbers = #tpu.dot_dimension_numbers<[1], [0], [0], [1], [0, 0, 1, 1], [], []>} : vector<16x256xf32>, vector<256x256xf32>, vector<16x256xf32> -> vector<16x256xf32>
    %53 = arith.addf %49, %52 : vector<16x256xf32>
    %c2_41 = arith.constant 2 : index
    %c0_42 = arith.constant 0 : index
    %c0_43 = arith.constant 0 : index
    %54 = vector.load %arg3[%c2_41, %c0_42, %c0_43] : memref<3x256x256xf32, #tpu.memory_space<vmem>>, vector<1x256x256xf32>
    %55 = vector.shape_cast %54 : vector<1x256x256xf32> to vector<256x256xf32>
    %cst_44 = arith.constant dense<0.000000e+00> : vector<16x256xf32>
    %56 = tpu.matmul %46, %55, %cst_44 {dimension_numbers = #tpu.dot_dimension_numbers<[1], [0], [0], [1], [0, 0, 1, 1], [], []>} : vector<16x256xf32>, vector<256x256xf32>, vector<16x256xf32> -> vector<16x256xf32>
    %57 = arith.addf %53, %56 : vector<16x256xf32>
    %cst_45 = arith.constant dense<0.000000e+00> : vector<16x256xf32>
    %58 = tpu.matmul %57, %2, %cst_45 {dimension_numbers = #tpu.dot_dimension_numbers<[1], [0], [0], [1], [0, 0, 1, 1], [], []>} : vector<16x256xf32>, vector<256x256xf32>, vector<16x256xf32> -> vector<16x256xf32>
    %59 = arith.mulf %57, %57 : vector<16x256xf32>
    %cst_46 = arith.constant dense<0.000000e+00> : vector<16x256xf32>
    %60 = tpu.matmul %59, %2, %cst_46 {dimension_numbers = #tpu.dot_dimension_numbers<[1], [0], [0], [1], [0, 0, 1, 1], [], []>} : vector<16x256xf32>, vector<256x256xf32>, vector<16x256xf32> -> vector<16x256xf32>
    %cst_47 = arith.constant dense<0.000000e+00> : vector<256xf32>
    %61 = vector.multi_reduction <add>, %58, %cst_47 [0] : vector<16x256xf32> to vector<256xf32>
    %62 = vector.shape_cast %61 : vector<256xf32> to vector<1x256xf32>
    %cst_48 = arith.constant 3.906250e-03 : f32
    %63 = vector.broadcast %cst_48 : f32 to vector<1x256xf32>
    %64 = arith.mulf %62, %63 : vector<1x256xf32>
    %cst_49 = arith.constant dense<0.000000e+00> : vector<256xf32>
    %65 = vector.multi_reduction <add>, %60, %cst_49 [0] : vector<16x256xf32> to vector<256xf32>
    %66 = vector.shape_cast %65 : vector<256xf32> to vector<1x256xf32>
    %cst_50 = arith.constant 3.906250e-03 : f32
    %67 = vector.broadcast %cst_50 : f32 to vector<1x256xf32>
    %68 = arith.mulf %66, %67 : vector<1x256xf32>
    %69 = arith.mulf %64, %64 : vector<1x256xf32>
    %70 = arith.subf %68, %69 : vector<1x256xf32>
    %cst_51 = arith.constant 0.000000e+00 : f32
    %71 = vector.broadcast %cst_51 : f32 to vector<1x256xf32>
    %72 = arith.maximumf %70, %71 : vector<1x256xf32>
    %73 = vector.broadcast %64 : vector<1x256xf32> to vector<16x256xf32>
    %74 = arith.subf %57, %73 : vector<16x256xf32>
    %cst_52 = arith.constant 9.99999974E-6 : f32
    %75 = vector.broadcast %cst_52 : f32 to vector<1x256xf32>
    %76 = arith.addf %72, %75 : vector<1x256xf32>
    %77 = math.rsqrt %76 : vector<1x256xf32>
    %78 = vector.broadcast %77 : vector<1x256xf32> to vector<16x256xf32>
    %79 = arith.mulf %74, %78 : vector<16x256xf32>
    %cst_53 = arith.constant 2.000000e+00 : f32
    %80 = vector.broadcast %cst_53 : f32 to vector<16x256xf32>
    %81 = arith.mulf %80, %1 : vector<16x256xf32>
    %82 = arith.addf %79, %81 : vector<16x256xf32>
    %83 = vector.broadcast %7 : f32 to vector<16x256xf32>
    %84 = arith.addf %82, %83 : vector<16x256xf32>
    %c0_54 = arith.constant 0 : index
    %c0_55 = arith.constant 0 : index
    %c0_56 = arith.constant 0 : index
    %85 = vector.load %arg7[%c0_54, %c0_55, %c0_56] : memref<1x16x256xf32, #tpu.memory_space<vmem>>, vector<1x16x256xf32>
    %86 = vector.shape_cast %85 : vector<1x16x256xf32> to vector<16x256xf32>
    %87 = vector.shape_cast %84 : vector<16x256xf32> to vector<1x16x256xf32>
    tpu.vector_store %arg7[%c0_54, %c0_55, %c0_56], %87 {strides = array<i32>} : memref<1x16x256xf32, #tpu.memory_space<vmem>>, vector<1x16x256xf32>,
    return
  }
  func.func @transform_0(%arg0: i32) -> (i32, i32, i32) {
    %c0_i32 = arith.constant 0 : i32
    %c0_i32_0 = arith.constant 0 : i32
    %c0_i32_1 = arith.constant 0 : i32
    return %arg0, %c0_i32, %c0_i32_0 : i32, i32, i32
  }
  func.func @transform_1(%arg0: i32) -> (i32, i32, i32) {
    %c0_i32 = arith.constant 0 : i32
    %c0_i32_0 = arith.constant 0 : i32
    %c0_i32_1 = arith.constant 0 : i32
    %c0_i32_2 = arith.constant 0 : i32
    return %c0_i32, %c0_i32_0, %c0_i32_1 : i32, i32, i32
  }
  func.func @transform_2(%arg0: i32) -> (i32, i32, i32) {
    %c0_i32 = arith.constant 0 : i32
    %c0_i32_0 = arith.constant 0 : i32
    %c0_i32_1 = arith.constant 0 : i32
    %c0_i32_2 = arith.constant 0 : i32
    return %c0_i32, %c0_i32_0, %c0_i32_1 : i32, i32, i32
  }
  func.func @transform_3(%arg0: i32) -> (i32, i32) {
    %c0_i32 = arith.constant 0 : i32
    %c0_i32_0 = arith.constant 0 : i32
    %c0_i32_1 = arith.constant 0 : i32
    return %c0_i32, %c0_i32_0 : i32, i32
  }
  func.func @transform_4(%arg0: i32) -> (i32, i32, i32) {
    %c0_i32 = arith.constant 0 : i32
    %c0_i32_0 = arith.constant 0 : i32
    %c0_i32_1 = arith.constant 0 : i32
    %c0_i32_2 = arith.constant 0 : i32
    return %c0_i32, %c0_i32_0, %c0_i32_1 : i32, i32, i32
  }
  func.func @transform_5(%arg0: i32) -> i32 {
    %c0_i32 = arith.constant 0 : i32
    %c0_i32_0 = arith.constant 0 : i32
    return %c0_i32 : i32
  }
  func.func @transform_6(%arg0: i32) -> (i32, i32, i32) {
    %c0_i32 = arith.constant 0 : i32
    %c0_i32_0 = arith.constant 0 : i32
    %c0_i32_1 = arith.constant 0 : i32
    return %arg0, %c0_i32, %c0_i32_0 : i32, i32, i32
  }
}

</mosaic_0001>

<llo_original>
// kernel: tpu_custom_call.1
$region0: #{tpu_custom_call.1}
  #allocation0 [shape = 'u32[]', space=smem, size = 0x4, offset = 0x4, fixed_abs, tag = 'smem constant byte address 0x4 - core index']
  #allocation1 [shape = 'u32[144,128]{1,0:T(1,128)}', space=vmem, size = 0x12000, scoped, tag = 'internal scratch']
  #allocation2 [shape = 'f32[1]{0:T(128)S(6)}', space=smem, size = 0x200, scoped, tag = 'scoped memory for tpu_custom_call.1']
  %s0 = inlined_call_operand.hbm [shape: f32[2,16,256], index: 0, kind: input, shape index: {}]
  %s1 = inlined_call_operand.hbm [shape: f32[3,256,256], index: 1, kind: input, shape index: {}]
  %s2 = inlined_call_operand.hbm [shape: f32[3,256,256], index: 2, kind: input, shape index: {}]
  %s3 = inlined_call_operand.hbm [shape: f32[256,256], index: 3, kind: input, shape index: {}]
  %s4 = inlined_call_operand.hbm [shape: f32[2,16,16], index: 4, kind: input, shape index: {}]
  %s5 = inlined_call_operand.<no memory space> [shape: f32[1], index: 5, kind: input, shape index: {}]
  %s6 = inlined_call_operand.hbm [shape: f32[2,16,256], index: 6, kind: output, shape index: {}]
  %s7 = sld [smem:[#allocation0]]
  $region77: #{tpu_custom_call.1} parent=0
    _
  %s9 = ssub.s32 1, %s7
  %s10 = scalar_select 0, %s9, %s7
  %11 = sst [smem:[#allocation2]] %s5
  $region1: #{tpu_custom_call.1} parent=0
    #allocation3 [shape = 'u8[32768]{0}', space=vmem, size = 0x8000, scoped, tag = 'input window, operand 0']
    #allocation4 [shape = 's32[2]{0}', space=sflag, size = 0x8, scoped, tag = 'scoped memory for tpu_custom_call.1']
    #allocation5 [shape = 's32[2]{0}', space=sflag, size = 0x8, scoped, tag = 'scoped memory for tpu_custom_call.1']
    #allocation6 [shape = 'u8[786432]{0}', space=vmem, size = 0xc0000, scoped, tag = 'input window, operand 1, single buffered']
    #allocation7 [shape = 's32[1]{0}', space=sflag, size = 0x4, scoped, tag = 'scoped memory for tpu_custom_call.1']
    #allocation8 [shape = 'u8[786432]{0}', space=vmem, size = 0xc0000, scoped, tag = 'input window, operand 2, single buffered']
    #allocation9 [shape = 'u8[262144]{0}', space=vmem, size = 0x40000, scoped, tag = 'input window, operand 3, single buffered']
    #allocation10 [shape = 's32[1]{0}', space=sflag, size = 0x4, scoped, tag = 'scoped memory for tpu_custom_call.1']
    #allocation11 [shape = 'u8[16384]{0}', space=vmem, size = 0x4000, scoped, tag = 'input window, operand 4, single buffered']
    #allocation12 [shape = 'u8[32768]{0}', space=vmem, size = 0x8000, scoped, tag = 'output window, operand 0']
    %12 = vsyncpa [#allocation4], 0
    %s13 = scalar_lea.sflag [#allocation4], 1
    %14 = vsyncpa %s13, 0
    %15 = vsyncpa [#allocation7], 0
    %16 = vsyncpa [#allocation10], 0
    %17 = vsyncpa [#allocation5], 0
    %s18 = scalar_lea.sflag [#allocation5], 1
    %19 = vsyncpa %s18, 0
    loop: start=0, step=1, limit=4
    $region2: #{tpu_custom_call.1} parent=1 // loop_pre_header
      _
    $region3: #{tpu_custom_call.1} parent=1 // loop_header
      %s21 = sphi 0, %s25
      %p22 = scmp.ge.s32.totalorder %s21, 4
      %s31 = sphi 0, %s33
      %s34 = sphi 0, %s31
      %s35 = sphi 0, %s34
      %s51 = sphi 0, %s35
      %s55 = sphi 0, %s55
      %s57 = sphi 0, %s55
      %s58 = sphi 0, %s57
      %s72 = sphi 0, %s58
      %s76 = sphi 0, %s76
      %s78 = sphi 0, %s76
      %s79 = sphi 0, %s78
      %s93 = sphi 0, %s79
      %s97 = sphi 0, %s97
      %s99 = sphi 0, %s97
      %s100 = sphi 0, %s99
      %s114 = sphi 0, %s100
      %s118 = sphi 0, %s118
      %s120 = sphi 0, %s118
      %s121 = sphi 0, %s120
      %s135 = sphi 0, %s121
      %s139 = sphi 0, %s139
      %s141 = sphi 0, %s139
      %s142 = sphi 0, %s141
      %s156 = sphi 0, %s142
      %s162 = sphi 0, %s164
      %s165 = sphi 0, %s162
      %s166 = sphi 0, %s165
      %s182 = sphi 0, %s166
    $region4: #{tpu_custom_call.1} parent=1 // loop_header_branch
      %24 = sbr.rel (%p22) target = $region8
    $region5: #{tpu_custom_call.1} parent=1 // loop_body
      %s26 = ssub.s32 %s21, 1
      %s27 = ssub.s32 %s21, 2
      %s28 = sadd.s32 %s21, 1
      %s29 = ssub.s32 %s21, %s28
      %p30 = scmp.eq.s32.totalorder %s29, 0
      %s32 = sadd.s32 %s31, 1
      %s33 = scalar_select %p30, %s31, %s32
      %p36 = pneg %p30
      %p37 = scmp.eq.s32.totalorder %s21, 1
      %p38 = por %p36, %p37
      %p39 = scmp.ne.s32.totalorder %s31, %s34
      %p40 = scmp.eq.s32.totalorder %s21, 0
      %p41 = por %p39, %p40
      %p42 = scmp.ne.s32.totalorder %s31, %s34
      %p43 = scmp.eq.s32.totalorder %s26, 1
      %p44 = por %p42, %p43
      %p45 = scmp.ne.s32.totalorder %s34, %s35
      %p46 = scmp.eq.s32.totalorder %s26, 0
      %p47 = por %p45, %p46
      %p48 = scmp.ne.s32.totalorder %s34, %s35
      %p49 = scmp.eq.s32.totalorder %s27, 1
      %p50 = por %p48, %p49
      %p52 = scmp.ne.s32.totalorder %s35, %s51
      %p53 = scmp.eq.s32.totalorder %s27, 0
      %p54 = por %p52, %p53
      %s56 = sadd.s32 %s55, 1
      %p59 = scmp.eq.s32.totalorder %s21, 1
      %p60 = scmp.ne.s32.totalorder %s55, %s57
      %p61 = scmp.eq.s32.totalorder %s21, 0
      %p62 = por %p60, %p61
      %p63 = scmp.ne.s32.totalorder %s55, %s57
      %p64 = scmp.eq.s32.totalorder %s26, 1
      %p65 = por %p63, %p64
      %p66 = scmp.ne.s32.totalorder %s57, %s58
      %p67 = scmp.eq.s32.totalorder %s26, 0
      %p68 = por %p66, %p67
      %p69 = scmp.ne.s32.totalorder %s57, %s58
      %p70 = scmp.eq.s32.totalorder %s27, 1
      %p71 = por %p69, %p70
      %p73 = scmp.ne.s32.totalorder %s58, %s72
      %p74 = scmp.eq.s32.totalorder %s27, 0
      %p75 = por %p73, %p74
      %s77 = sadd.s32 %s76, 1
      %p80 = scmp.eq.s32.totalorder %s21, 1
      %p81 = scmp.ne.s32.totalorder %s76, %s78
      %p82 = scmp.eq.s32.totalorder %s21, 0
      %p83 = por %p81, %p82
      %p84 = scmp.ne.s32.totalorder %s76, %s78
      %p85 = scmp.eq.s32.totalorder %s26, 1
      %p86 = por %p84, %p85
      %p87 = scmp.ne.s32.totalorder %s78, %s79
      %p88 = scmp.eq.s32.totalorder %s26, 0
      %p89 = por %p87, %p88
      %p90 = scmp.ne.s32.totalorder %s78, %s79
      %p91 = scmp.eq.s32.totalorder %s27, 1
      %p92 = por %p90, %p91
      %p94 = scmp.ne.s32.totalorder %s79, %s93
      %p95 = scmp.eq.s32.totalorder %s27, 0
      %p96 = por %p94, %p95
      %s98 = sadd.s32 %s97, 1
      %p101 = scmp.eq.s32.totalorder %s21, 1
      %p102 = scmp.ne.s32.totalorder %s97, %s99
      %p103 = scmp.eq.s32.totalorder %s21, 0
      %p104 = por %p102, %p103
      %p105 = scmp.ne.s32.totalorder %s97, %s99
      %p106 = scmp.eq.s32.totalorder %s26, 1
      %p107 = por %p105, %p106
      %p108 = scmp.ne.s32.totalorder %s99, %s100
      %p109 = scmp.eq.s32.totalorder %s26, 0
      %p110 = por %p108, %p109
      %p111 = scmp.ne.s32.totalorder %s99, %s100
      %p112 = scmp.eq.s32.totalorder %s27, 1
      %p113 = por %p111, %p112
      %p115 = scmp.ne.s32.totalorder %s100, %s114
      %p116 = scmp.eq.s32.totalorder %s27, 0
      %p117 = por %p115, %p116
      %s119 = sadd.s32 %s118, 1
      %p122 = scmp.eq.s32.totalorder %s21, 1
      %p123 = scmp.ne.s32.totalorder %s118, %s120
      %p124 = scmp.eq.s32.totalorder %s21, 0
      %p125 = por %p123, %p124
      %p126 = scmp.ne.s32.totalorder %s118, %s120
      %p127 = scmp.eq.s32.totalorder %s26, 1
      %p128 = por %p126, %p127
      %p129 = scmp.ne.s32.totalorder %s120, %s121
      %p130 = scmp.eq.s32.totalorder %s26, 0
      %p131 = por %p129, %p130
      %p132 = scmp.ne.s32.totalorder %s120, %s121
      %p133 = scmp.eq.s32.totalorder %s27, 1
      %p134 = por %p132, %p133
      %p136 = scmp.ne.s32.totalorder %s121, %s135
      %p137 = scmp.eq.s32.totalorder %s27, 0
      %p138 = por %p136, %p137
      %s140 = sadd.s32 %s139, 1
      %p143 = scmp.eq.s32.totalorder %s21, 1
      %p144 = scmp.ne.s32.totalorder %s139, %s141
      %p145 = scmp.eq.s32.totalorder %s21, 0
      %p146 = por %p144, %p145
      %p147 = scmp.ne.s32.totalorder %s139, %s141
      %p148 = scmp.eq.s32.totalorder %s26, 1
      %p149 = por %p147, %p148
      %p150 = scmp.ne.s32.totalorder %s141, %s142
      %p151 = scmp.eq.s32.totalorder %s26, 0
      %p152 = por %p150, %p151
      %p153 = scmp.ne.s32.totalorder %s141, %s142
      %p154 = scmp.eq.s32.totalorder %s27, 1
      %p155 = por %p153, %p154
      %p157 = scmp.ne.s32.totalorder %s142, %s156
      %p158 = scmp.eq.s32.totalorder %s27, 0
      %p159 = por %p157, %p158
      %s160 = ssub.s32 %s21, %s28
      %p161 = scmp.eq.s32.totalorder %s160, 0
      %s163 = sadd.s32 %s162, 1
      %s164 = scalar_select %p161, %s162, %s163
      %p167 = pneg %p161
      %p168 = scmp.eq.s32.totalorder %s21, 1
      %p169 = por %p167, %p168
      %p170 = scmp.ne.s32.totalorder %s162, %s165
      %p171 = scmp.eq.s32.totalorder %s21, 0
      %p172 = por %p170, %p171
      %p173 = scmp.ne.s32.totalorder %s162, %s165
      %p174 = scmp.eq.s32.totalorder %s26, 1
      %p175 = por %p173, %p174
      %p176 = scmp.ne.s32.totalorder %s165, %s166
      %p177 = scmp.eq.s32.totalorder %s26, 0
      %p178 = por %p176, %p177
      %p179 = scmp.ne.s32.totalorder %s165, %s166
      %p180 = scmp.eq.s32.totalorder %s27, 1
      %p181 = por %p179, %p180
      %p183 = scmp.ne.s32.totalorder %s166, %s182
      %p184 = scmp.eq.s32.totalorder %s27, 0
      %p185 = por %p183, %p184
      %p186 = scmp.le.s32.totalorder 1, %s21
      %p187 = scmp.lt.s32.totalorder %s21, 3
      %p188 = pnand %p186, %p187
      %p189 = pneg %p188
      // Predicated region
      $region9: #{tpu_custom_call.1} parent=5 // pred_check
        _
      $region10: #{tpu_custom_call.1} parent=5 // pred_check_branch
        %191 = sbr.rel (%p188) target = $region12
      $region11: #{tpu_custom_call.1} parent=5 // pred_region
        %s192 = ssub.s32 %s21, 1
        // Predicated region
        $region13: #{tpu_custom_call.1} parent=11 // pred_check
          %p193 = pneg %p68
        $region14: #{tpu_custom_call.1} parent=11 // pred_check_branch
          %195 = sbr.rel (%p193) target = $region16
        $region15: #{tpu_custom_call.1} parent=11 // pred_region
          %s197 = ssub.s32 24576, 24576
          %198 = vsyncadd [#allocation7], %s197
          %s199 = sshll.u32 [#allocation6], 4
          %s200 = int_to_ptr.vmem [resolvable:$true] %s199
          %205 = dma.hbm_to_vmem [thread:$0]  %s1, 24576, %s200, [#allocation7], 256, 256, 16
        $region16: #{tpu_custom_call.1} parent=11 // pred_fallthru
          _
        // Predicated region
        $region17: #{tpu_custom_call.1} parent=11 // pred_check
          %p206 = pneg %p89
        $region18: #{tpu_custom_call.1} parent=11 // pred_check_branch
          %208 = sbr.rel (%p206) target = $region20
        $region19: #{tpu_custom_call.1} parent=11 // pred_region
          %s210 = ssub.s32 24576, 24576
          %211 = vsyncadd [#allocation7], %s210
          %s212 = sshll.u32 [#allocation8], 4
          %s213 = int_to_ptr.vmem [resolvable:$true] %s212
          %218 = dma.hbm_to_vmem [thread:$0]  %s2, 24576, %s213, [#allocation7], 256, 256, 16
        $region20: #{tpu_custom_call.1} parent=11 // pred_fallthru
          _
        // Predicated region
        $region21: #{tpu_custom_call.1} parent=11 // pred_check
          %p219 = pneg %p110
        $region22: #{tpu_custom_call.1} parent=11 // pred_check_branch
          %221 = sbr.rel (%p219) target = $region24
        $region23: #{tpu_custom_call.1} parent=11 // pred_region
          %s223 = ssub.s32 8192, 8192
          %224 = vsyncadd [#allocation10], %s223
          %s225 = sshll.u32 [#allocation9], 4
          %s226 = int_to_ptr.vmem [resolvable:$true] %s225
          %231 = dma.hbm_to_vmem [thread:$0]  %s3, 8192, %s226, [#allocation10], 256, 256, 16
        $region24: #{tpu_custom_call.1} parent=11 // pred_fallthru
          _
        // Predicated region
        $region25: #{tpu_custom_call.1} parent=11 // pred_check
          %p232 = pneg %p131
        $region26: #{tpu_custom_call.1} parent=11 // pred_check_branch
          %234 = sbr.rel (%p232) target = $region28
        $region27: #{tpu_custom_call.1} parent=11 // pred_region
          %s236 = ssub.s32 512, 512
          %237 = vsyncadd [#allocation10], %s236
          %s238 = sshll.u32 [#allocation11], 4
          %s239 = int_to_ptr.vmem [resolvable:$true] %s238
          %244 = dma.hbm_to_vmem [thread:$0]  %s4, 512, %s239, [#allocation10], 128, 128, 8
        $region28: #{tpu_custom_call.1} parent=11 // pred_fallthru
          _
        // Predicated region
        $region29: #{tpu_custom_call.1} parent=11 // pred_check
          %p245 = pneg %p152
        $region30: #{tpu_custom_call.1} parent=11 // pred_check_branch
          %247 = sbr.rel (%p245) target = $region32
        $region31: #{tpu_custom_call.1} parent=11 // pred_region
          _
        $region32: #{tpu_custom_call.1} parent=11 // pred_fallthru
          _
      $region12: #{tpu_custom_call.1} parent=5 // pred_fallthru
        _
      %p248 = scmp.lt.s32.totalorder %s21, 2
      // Predicated region
      $region33: #{tpu_custom_call.1} parent=5 // pred_check
        %p249 = pneg %p248
      $region34: #{tpu_custom_call.1} parent=5 // pred_check_branch
        %251 = sbr.rel (%p249) target = $region36
      $region35: #{tpu_custom_call.1} parent=5 // pred_region
        // Predicated region
        $region37: #{tpu_custom_call.1} parent=35 // pred_check
          %p252 = pneg %p41
        $region38: #{tpu_custom_call.1} parent=35 // pred_check_branch
          %254 = sbr.rel (%p252) target = $region40
        $region39: #{tpu_custom_call.1} parent=35 // pred_region
          %s255 = sand.u32 %s31, 1
          %s256 = scalar_lea.sflag [#allocation4], %s255
          %s257 = sand.u32 %s31, 1
          %s258 = smul.addr %s257, 32
          %s259 = scalar_lea.vmem [#allocation3], %s258
          %s261 = ssub.s32 512, 512
          %262 = vsyncadd %s256, %s261
          %s263 = smul.addr %s21, 4
          %s264 = smul.addr %s263, 128
          %s265 = scalar_lea.hbm %s0, %s264
          %s266 = sshll.u32 %s259, 4
          %s267 = int_to_ptr.vmem [resolvable:$true] %s266
          %272 = dma.hbm_to_vmem [thread:$0]  %s265, 512, %s267, %s256, 256, 256, 16
        $region40: #{tpu_custom_call.1} parent=35 // pred_fallthru
          _
      $region36: #{tpu_custom_call.1} parent=5 // pred_fallthru
        _
      %p273 = scmp.le.s32.totalorder 1, %s21
      %p274 = scmp.lt.s32.totalorder %s21, 3
      %p275 = pnand %p273, %p274
      %p276 = pneg %p275
      // Predicated region
      $region41: #{tpu_custom_call.1} parent=5 // pred_check
        _
      $region42: #{tpu_custom_call.1} parent=5 // pred_check_branch
        %278 = sbr.rel (%p275) target = $region44
      $region43: #{tpu_custom_call.1} parent=5 // pred_region
        %s279 = ssub.s32 %s21, 1
        %s280 = sand.u32 %s34, 1
        %s281 = scalar_lea.sflag [#allocation4], %s280
        %s282 = sand.u32 %s34, 1
        %s283 = smul.addr %s282, 32
        %s284 = scalar_lea.vmem [#allocation3], %s283
        // Predicated region
        $region45: #{tpu_custom_call.1} parent=43 // pred_check
          %p285 = pneg %p47
        $region46: #{tpu_custom_call.1} parent=43 // pred_check_branch
          %287 = sbr.rel (%p285) target = $region48
        $region47: #{tpu_custom_call.1} parent=43 // pred_region
          %288 = dma.done %s281, 512
        $region48: #{tpu_custom_call.1} parent=43 // pred_fallthru
          _
        // Predicated region
        $region49: #{tpu_custom_call.1} parent=43 // pred_check
          %p289 = pneg %p68
        $region50: #{tpu_custom_call.1} parent=43 // pred_check_branch
          %291 = sbr.rel (%p289) target = $region52
        $region51: #{tpu_custom_call.1} parent=43 // pred_region
          %292 = dma.done [#allocation7], 24576
        $region52: #{tpu_custom_call.1} parent=43 // pred_fallthru
          _
        // Predicated region
        $region53: #{tpu_custom_call.1} parent=43 // pred_check
          %p293 = pneg %p89
        $region54: #{tpu_custom_call.1} parent=43 // pred_check_branch
          %295 = sbr.rel (%p293) target = $region56
        $region55: #{tpu_custom_call.1} parent=43 // pred_region
          %296 = dma.done [#allocation7], 24576
        $region56: #{tpu_custom_call.1} parent=43 // pred_fallthru
          _
        // Predicated region
        $region57: #{tpu_custom_call.1} parent=43 // pred_check
          %p297 = pneg %p110
        $region58: #{tpu_custom_call.1} parent=43 // pred_check_branch
          %299 = sbr.rel (%p297) target = $region60
        $region59: #{tpu_custom_call.1} parent=43 // pred_region
          %300 = dma.done [#allocation10], 8192
        $region60: #{tpu_custom_call.1} parent=43 // pred_fallthru
          _
        // Predicated region
        $region61: #{tpu_custom_call.1} parent=43 // pred_check
          %p301 = pneg %p131
        $region62: #{tpu_custom_call.1} parent=43 // pred_check_branch
          %303 = sbr.rel (%p301) target = $region64
        $region63: #{tpu_custom_call.1} parent=43 // pred_region
          %304 = dma.done [#allocation10], 512
        $region64: #{tpu_custom_call.1} parent=43 // pred_fallthru
          _
        %s305 = sand.u32 %s34, 1
        %s306 = scalar_lea.sflag [#allocation4], %s305
        %s307 = sand.u32 %s34, 1
        %s308 = smul.addr %s307, 32
        %s309 = scalar_lea.vmem [#allocation3], %s308
        %p310 = pneg %p47
        %p311 = pneg %p44
        %p312 = pneg %p68
        %p313 = pneg %p65
        %p314 = pneg %p89
        %p315 = pneg %p86
        %p316 = pneg %p110
        %p317 = pneg %p107
        %p318 = pneg %p131
        %p319 = pneg %p128
        %p320 = pneg %p152
        %p321 = pneg %p149
        %p322 = pneg %p178
        %p323 = pneg %p175
        %s324 = sand.u32 %s165, 1
        %s325 = scalar_lea.sflag [#allocation5], %s324
        %s326 = sand.u32 %s165, 1
        %s327 = smul.addr %s326, 32
        %s328 = scalar_lea.vmem [#allocation12], %s327
        %v329 = vld [vmem:[%s284] sm:$0xff]
        %v330 = vld [vmem:[%s284 + $0x8] sm:$0xff]
        %v331 = vld [vmem:[%s284 + $0x10] sm:$0xff]
        %v332 = vld [vmem:[%s284 + $0x18] sm:$0xff]
        %v333 = vld [vmem:[#allocation9] sm:$0xff]
        %v334 = vld [vmem:[#allocation9 + $0x8] sm:$0xff]
        %v335 = vld [vmem:[#allocation9 + $0x10] sm:$0xff]
        %v336 = vld [vmem:[#allocation9 + $0x18] sm:$0xff]
        %v337 = vld [vmem:[#allocation9 + $0x20] sm:$0xff]
        %v338 = vld [vmem:[#allocation9 + $0x28] sm:$0xff]
        %v339 = vld [vmem:[#allocation9 + $0x30] sm:$0xff]
        %v340 = vld [vmem:[#allocation9 + $0x38] sm:$0xff]
        %v341 = vld [vmem:[#allocation9 + $0x40] sm:$0xff]
        %v342 = vld [vmem:[#allocation9 + $0x48] sm:$0xff]
        %v343 = vld [vmem:[#allocation9 + $0x50] sm:$0xff]
        %v344 = vld [vmem:[#allocation9 + $0x58] sm:$0xff]
        %v345 = vld [vmem:[#allocation9 + $0x60] sm:$0xff]
        %v346 = vld [vmem:[#allocation9 + $0x68] sm:$0xff]
        %v347 = vld [vmem:[#allocation9 + $0x70] sm:$0xff]
        %v348 = vld [vmem:[#allocation9 + $0x78] sm:$0xff]
        %v349 = vld [vmem:[#allocation9 + $0x80] sm:$0xff]
        %v350 = vld [vmem:[#allocation9 + $0x88] sm:$0xff]
        %v351 = vld [vmem:[#allocation9 + $0x90] sm:$0xff]
        %v352 = vld [vmem:[#allocation9 + $0x98] sm:$0xff]
        %v353 = vld [vmem:[#allocation9 + $0xa0] sm:$0xff]
        %v354 = vld [vmem:[#allocation9 + $0xa8] sm:$0xff]
        %v355 = vld [vmem:[#allocation9 + $0xb0] sm:$0xff]
        %v356 = vld [vmem:[#allocation9 + $0xb8] sm:$0xff]
        %v357 = vld [vmem:[#allocation9 + $0xc0] sm:$0xff]
        %v358 = vld [vmem:[#allocation9 + $0xc8] sm:$0xff]
        %v359 = vld [vmem:[#allocation9 + $0xd0] sm:$0xff]
        %v360 = vld [vmem:[#allocation9 + $0xd8] sm:$0xff]
        %v361 = vld [vmem:[#allocation9 + $0xe0] sm:$0xff]
        %v362 = vld [vmem:[#allocation9 + $0xe8] sm:$0xff]
        %v363 = vld [vmem:[#allocation9 + $0xf0] sm:$0xff]
        %v364 = vld [vmem:[#allocation9 + $0xf8] sm:$0xff]
        %v365 = vld [vmem:[#allocation9 + $0x100] sm:$0xff]
        %v366 = vld [vmem:[#allocation9 + $0x108] sm:$0xff]
        %v367 = vld [vmem:[#allocation9 + $0x110] sm:$0xff]
        %v368 = vld [vmem:[#allocation9 + $0x118] sm:$0xff]
        %v369 = vld [vmem:[#allocation9 + $0x120] sm:$0xff]
        %v370 = vld [vmem:[#allocation9 + $0x128] sm:$0xff]
        %v371 = vld [vmem:[#allocation9 + $0x130] sm:$0xff]
        %v372 = vld [vmem:[#allocation9 + $0x138] sm:$0xff]
        %v373 = vld [vmem:[#allocation9 + $0x140] sm:$0xff]
        %v374 = vld [vmem:[#allocation9 + $0x148] sm:$0xff]
        %v375 = vld [vmem:[#allocation9 + $0x150] sm:$0xff]
        %v376 = vld [vmem:[#allocation9 + $0x158] sm:$0xff]
        %v377 = vld [vmem:[#allocation9 + $0x160] sm:$0xff]
        %v378 = vld [vmem:[#allocation9 + $0x168] sm:$0xff]
        %v379 = vld [vmem:[#allocation9 + $0x170] sm:$0xff]
        %v380 = vld [vmem:[#allocation9 + $0x178] sm:$0xff]
        %v381 = vld [vmem:[#allocation9 + $0x180] sm:$0xff]
        %v382 = vld [vmem:[#allocation9 + $0x188] sm:$0xff]
        %v383 = vld [vmem:[#allocation9 + $0x190] sm:$0xff]
        %v384 = vld [vmem:[#allocation9 + $0x198] sm:$0xff]
        %v385 = vld [vmem:[#allocation9 + $0x1a0] sm:$0xff]
        %v386 = vld [vmem:[#allocation9 + $0x1a8] sm:$0xff]
        %v387 = vld [vmem:[#allocation9 + $0x1b0] sm:$0xff]
        %v388 = vld [vmem:[#allocation9 + $0x1b8] sm:$0xff]
        %v389 = vld [vmem:[#allocation9 + $0x1c0] sm:$0xff]
        %v390 = vld [vmem:[#allocation9 + $0x1c8] sm:$0xff]
        %v391 = vld [vmem:[#allocation9 + $0x1d0] sm:$0xff]
        %v392 = vld [vmem:[#allocation9 + $0x1d8] sm:$0xff]
        %v393 = vld [vmem:[#allocation9 + $0x1e0] sm:$0xff]
        %v394 = vld [vmem:[#allocation9 + $0x1e8] sm:$0xff]
        %v395 = vld [vmem:[#allocation9 + $0x1f0] sm:$0xff]
        %v396 = vld [vmem:[#allocation9 + $0x1f8] sm:$0xff]
        %v397 = vld [vmem:[#allocation11] sm:$0xff]
        %v398 = vld [vmem:[#allocation11 + $0x8] sm:$0xff]
        %s399 = scalar_lea.vmem [#allocation11], 16
        %v400 = vld [vmem:[%s399] sm:$0xff]
        %v401 = vld [vmem:[%s399 + $0x8] sm:$0xff]
        %s402 = sld [smem:[#allocation2]]
        %vm403 = vcmask 130048
        %v405 = vsel %vm403, %v397, 0
        %v408 = vsel %vm403, %v398, 0
        %410 = vmatprep.subr.mxu0 0.0
        %411 = vmatpush1.msra.mxu0 0.0
        %412 = vmatprep.subr.mxu0 0.0
        %413 = vmatpush1.msra.mxu0 0.0
        %414 = vmatprep.subr.mxu0 0.0
        %415 = vmatpush1.msra.mxu0 0.0
        %416 = vmatprep.subr.mxu0 0.0
        %417 = vmatpush1.msra.mxu0 0.0
        %418 = vmatprep.subr.mxu0 0.0
        %419 = vmatpush1.msra.mxu0 0.0
        %420 = vmatprep.subr.mxu0 0.0
        %421 = vmatpush1.msra.mxu0 0.0
        %422 = vmatprep.subr.mxu0 0.0
        %423 = vmatpush1.msra.mxu0 0.0
        %424 = vmatprep.subr.mxu0 0.0
        %425 = vmatpush1.msra.mxu0 0.0
        %426 = vmatprep.subr.mxu0 0.0
        %427 = vmatpush1.msra.mxu0 0.0
        %428 = vmatprep.subr.mxu0 0.0
        %429 = vmatpush1.msra.mxu0 0.0
        %430 = vmatprep.subr.mxu0 0.0
        %431 = vmatpush1.msra.mxu0 0.0
        %432 = vmatprep.subr.mxu0 0.0
        %433 = vmatpush1.msra.mxu0 0.0
        %434 = vmatprep.subr.mxu0 0.0
        %435 = vmatpush1.msra.mxu0 0.0
        %436 = vmatprep.subr.mxu0 0.0
        %437 = vmatpush1.msra.mxu0 0.0
        %438 = vmatprep.subr.mxu0 %v332
        %439 = vmatpush1.msra.mxu0 %v331
        %440 = vmatprep.subr.mxu0 %v330
        %441 = vmatpush1.msra.mxu0 %v329
        %442 = vmatprep.subr.mxu0 0.0
        %443 = vmatpush2.msra.mxu0 0.0
        %444 = vmatprep.subr.mxu0 0.0
        %445 = vmatpush2.msra.mxu0 0.0
        %446 = vmatprep.subr.mxu0 0.0
        %447 = vmatpush2.msra.mxu0 0.0
        %448 = vmatprep.subr.mxu0 0.0
        %449 = vmatpush2.msra.mxu0 0.0
        %450 = vmatprep.subr.mxu0 0.0
        %451 = vmatpush2.msra.mxu0 0.0
        %452 = vmatprep.subr.mxu0 0.0
        %453 = vmatpush2.msra.mxu0 0.0
        %454 = vmatprep.subr.mxu0 0.0
        %455 = vmatpush2.msra.mxu0 0.0
        %456 = vmatprep.subr.mxu0 0.0
        %457 = vmatpush2.msra.mxu0 0.0
        %458 = vmatprep.subr.mxu0 0.0
        %459 = vmatpush2.msra.mxu0 0.0
        %460 = vmatprep.subr.mxu0 0.0
        %461 = vmatpush2.msra.mxu0 0.0
        %462 = vmatprep.subr.mxu0 0.0
        %463 = vmatpush2.msra.mxu0 0.0
        %464 = vmatprep.subr.mxu0 0.0
        %465 = vmatpush2.msra.mxu0 0.0
        %466 = vmatprep.subr.mxu0 0.0
        %467 = vmatpush2.msra.mxu0 0.0
        %468 = vmatprep.subr.mxu0 0.0
        %469 = vmatpush2.msra.mxu0 0.0
        %470 = vmatprep.subr.mxu0 0.0
        %471 = vmatpush2.msra.mxu0 0.0
        %472 = vmatprep.subr.mxu0 0.0
        %473 = vmatpush2.msra.mxu0 0.0
        %474 = vmatprep.mubr.f32.mxu0 0.0
        %475 = vmatmul.mubr.f32.gmra.mxu0 %v405
        %v476 = vpop.f32.mrf.mxu0
        %v477 = vadd.f32 0.0, %v476
        %v478 = vpop.f32.mrf.mxu0
        %v479 = vadd.f32 0.0, %v478
        %480 = vmatprep.mubr.f32.mxu0 0.0
        %481 = vmatmul.mubr.f32.gmra.mxu0 %v408
        %v482 = vpop.f32.mrf.mxu0
        %v483 = vadd.f32 0.0, %v482
        %v484 = vpop.f32.mrf.mxu0
        %v485 = vadd.f32 0.0, %v484
        %486 = vdwg.mxu0
        %v488 = vsel %vm403, %v400, 0
        %v491 = vsel %vm403, %v401, 0
        %493 = vmatprep.subr.mxu0 0.0
        %494 = vmatpush1.msra.mxu0 0.0
        %495 = vmatprep.subr.mxu0 0.0
        %496 = vmatpush1.msra.mxu0 0.0
        %497 = vmatprep.subr.mxu0 0.0
        %498 = vmatpush1.msra.mxu0 0.0
        %499 = vmatprep.subr.mxu0 0.0
        %500 = vmatpush1.msra.mxu0 0.0
        %501 = vmatprep.subr.mxu0 0.0
        %502 = vmatpush1.msra.mxu0 0.0
        %503 = vmatprep.subr.mxu0 0.0
        %504 = vmatpush1.msra.mxu0 0.0
        %505 = vmatprep.subr.mxu0 0.0
        %506 = vmatpush1.msra.mxu0 0.0
        %507 = vmatprep.subr.mxu0 0.0
        %508 = vmatpush1.msra.mxu0 0.0
        %509 = vmatprep.subr.mxu0 0.0
        %510 = vmatpush1.msra.mxu0 0.0
        %511 = vmatprep.subr.mxu0 0.0
        %512 = vmatpush1.msra.mxu0 0.0
        %513 = vmatprep.subr.mxu0 0.0
        %514 = vmatpush1.msra.mxu0 0.0
        %515 = vmatprep.subr.mxu0 0.0
        %516 = vmatpush1.msra.mxu0 0.0
        %517 = vmatprep.subr.mxu0 0.0
        %518 = vmatpush1.msra.mxu0 0.0
        %519 = vmatprep.subr.mxu0 0.0
        %520 = vmatpush1.msra.mxu0 0.0
        %521 = vmatprep.subr.mxu0 %v332
        %522 = vmatpush1.msra.mxu0 %v331
        %523 = vmatprep.subr.mxu0 %v330
        %524 = vmatpush1.msra.mxu0 %v329
        %525 = vmatprep.subr.mxu0 0.0
        %526 = vmatpush2.msra.mxu0 0.0
        %527 = vmatprep.subr.mxu0 0.0
        %528 = vmatpush2.msra.mxu0 0.0
        %529 = vmatprep.subr.mxu0 0.0
        %530 = vmatpush2.msra.mxu0 0.0
        %531 = vmatprep.subr.mxu0 0.0
        %532 = vmatpush2.msra.mxu0 0.0
        %533 = vmatprep.subr.mxu0 0.0
        %534 = vmatpush2.msra.mxu0 0.0
        %535 = vmatprep.subr.mxu0 0.0
        %536 = vmatpush2.msra.mxu0 0.0
        %537 = vmatprep.subr.mxu0 0.0
        %538 = vmatpush2.msra.mxu0 0.0
        %539 = vmatprep.subr.mxu0 0.0
        %540 = vmatpush2.msra.mxu0 0.0
        %541 = vmatprep.subr.mxu0 0.0
        %542 = vmatpush2.msra.mxu0 0.0
        %543 = vmatprep.subr.mxu0 0.0
        %544 = vmatpush2.msra.mxu0 0.0
        %545 = vmatprep.subr.mxu0 0.0
        %546 = vmatpush2.msra.mxu0 0.0
        %547 = vmatprep.subr.mxu0 0.0
        %548 = vmatpush2.msra.mxu0 0.0
        %549 = vmatprep.subr.mxu0 0.0
        %550 = vmatpush2.msra.mxu0 0.0
        %551 = vmatprep.subr.mxu0 0.0
        %552 = vmatpush2.msra.mxu0 0.0
        %553 = vmatprep.subr.mxu0 0.0
        %554 = vmatpush2.msra.mxu0 0.0
        %555 = vmatprep.subr.mxu0 0.0
        %556 = vmatpush2.msra.mxu0 0.0
        %557 = vmatprep.mubr.f32.mxu0 0.0
        %558 = vmatmul.mubr.f32.gmra.mxu0 %v488
        %v559 = vpop.f32.mrf.mxu0
        %v560 = vadd.f32 0.0, %v559
        %v561 = vpop.f32.mrf.mxu0
        %v562 = vadd.f32 0.0, %v561
        %563 = vmatprep.mubr.f32.mxu0 0.0
        %564 = vmatmul.mubr.f32.gmra.mxu0 %v491
        %v565 = vpop.f32.mrf.mxu0
        %v566 = vadd.f32 0.0, %v565
        %v567 = vpop.f32.mrf.mxu0
        %v568 = vadd.f32 0.0, %v567
        %569 = vdwg.mxu0
        %v570 = vld [vmem:[#allocation6] sm:$0xff]
        %v571 = vld [vmem:[#allocation6 + $0x8] sm:$0xff]
        %v572 = vld [vmem:[#allocation6 + $0x10] sm:$0xff]
        %v573 = vld [vmem:[#allocation6 + $0x18] sm:$0xff]
        %v574 = vld [vmem:[#allocation6 + $0x20] sm:$0xff]
        %v575 = vld [vmem:[#allocation6 + $0x28] sm:$0xff]
        %v576 = vld [vmem:[#allocation6 + $0x30] sm:$0xff]
        %v577 = vld [vmem:[#allocation6 + $0x38] sm:$0xff]
        %v578 = vld [vmem:[#allocation6 + $0x40] sm:$0xff]
        %v579 = vld [vmem:[#allocation6 + $0x48] sm:$0xff]
        %v580 = vld [vmem:[#allocation6 + $0x50] sm:$0xff]
        %v581 = vld [vmem:[#allocation6 + $0x58] sm:$0xff]
        %v582 = vld [vmem:[#allocation6 + $0x60] sm:$0xff]
        %v583 = vld [vmem:[#allocation6 + $0x68] sm:$0xff]
        %v584 = vld [vmem:[#allocation6 + $0x70] sm:$0xff]
        %v585 = vld [vmem:[#allocation6 + $0x78] sm:$0xff]
        %v586 = vld [vmem:[#allocation6 + $0x80] sm:$0xff]
        %v587 = vld [vmem:[#allocation6 + $0x88] sm:$0xff]
        %v588 = vld [vmem:[#allocation6 + $0x90] sm:$0xff]
        %v589 = vld [vmem:[#allocation6 + $0x98] sm:$0xff]
        %v590 = vld [vmem:[#allocation6 + $0xa0] sm:$0xff]
        %v591 = vld [vmem:[#allocation6 + $0xa8] sm:$0xff]
        %v592 = vld [vmem:[#allocation6 + $0xb0] sm:$0xff]
        %v593 = vld [vmem:[#allocation6 + $0xb8] sm:$0xff]
        %v594 = vld [vmem:[#allocation6 + $0xc0] sm:$0xff]
        %v595 = vld [vmem:[#allocation6 + $0xc8] sm:$0xff]
        %v596 = vld [vmem:[#allocation6 + $0xd0] sm:$0xff]
        %v597 = vld [vmem:[#allocation6 + $0xd8] sm:$0xff]
        %v598 = vld [vmem:[#allocation6 + $0xe0] sm:$0xff]
        %v599 = vld [vmem:[#allocation6 + $0xe8] sm:$0xff]
        %v600 = vld [vmem:[#allocation6 + $0xf0] sm:$0xff]
        %v601 = vld [vmem:[#allocation6 + $0xf8] sm:$0xff]
        %v602 = vld [vmem:[#allocation6 + $0x100] sm:$0xff]
        %v603 = vld [vmem:[#allocation6 + $0x108] sm:$0xff]
        %v604 = vld [vmem:[#allocation6 + $0x110] sm:$0xff]
        %v605 = vld [vmem:[#allocation6 + $0x118] sm:$0xff]
        %v606 = vld [vmem:[#allocation6 + $0x120] sm:$0xff]
        %v607 = vld [vmem:[#allocation6 + $0x128] sm:$0xff]
        %v608 = vld [vmem:[#allocation6 + $0x130] sm:$0xff]
        %v609 = vld [vmem:[#allocation6 + $0x138] sm:$0xff]
        %v610 = vld [vmem:[#allocation6 + $0x140] sm:$0xff]
        %v611 = vld [vmem:[#allocation6 + $0x148] sm:$0xff]
        %v612 = vld [vmem:[#allocation6 + $0x150] sm:$0xff]
        %v613 = vld [vmem:[#allocation6 + $0x158] sm:$0xff]
        %v614 = vld [vmem:[#allocation6 + $0x160] sm:$0xff]
        %v615 = vld [vmem:[#allocation6 + $0x168] sm:$0xff]
        %v616 = vld [vmem:[#allocation6 + $0x170] sm:$0xff]
        %v617 = vld [vmem:[#allocation6 + $0x178] sm:$0xff]
        %v618 = vld [vmem:[#allocation6 + $0x180] sm:$0xff]
        %v619 = vld [vmem:[#allocation6 + $0x188] sm:$0xff]
        %v620 = vld [vmem:[#allocation6 + $0x190] sm:$0xff]
        %v621 = vld [vmem:[#allocation6 + $0x198] sm:$0xff]
        %v622 = vld [vmem:[#allocation6 + $0x1a0] sm:$0xff]
        %v623 = vld [vmem:[#allocation6 + $0x1a8] sm:$0xff]
        %v624 = vld [vmem:[#allocation6 + $0x1b0] sm:$0xff]
        %v625 = vld [vmem:[#allocation6 + $0x1b8] sm:$0xff]
        %v626 = vld [vmem:[#allocation6 + $0x1c0] sm:$0xff]
        %v627 = vld [vmem:[#allocation6 + $0x1c8] sm:$0xff]
        %v628 = vld [vmem:[#allocation6 + $0x1d0] sm:$0xff]
        %v629 = vld [vmem:[#allocation6 + $0x1d8] sm:$0xff]
        %v630 = vld [vmem:[#allocation6 + $0x1e0] sm:$0xff]
        %v631 = vld [vmem:[#allocation6 + $0x1e8] sm:$0xff]
        %v632 = vld [vmem:[#allocation6 + $0x1f0] sm:$0xff]
        %v633 = vld [vmem:[#allocation6 + $0x1f8] sm:$0xff]
        %s634 = scalar_lea.vmem [#allocation6], 512
        %v635 = vld [vmem:[%s634] sm:$0xff]
        %v636 = vld [vmem:[%s634 + $0x8] sm:$0xff]
        %v637 = vld [vmem:[%s634 + $0x10] sm:$0xff]
        %v638 = vld [vmem:[%s634 + $0x18] sm:$0xff]
        %v639 = vld [vmem:[%s634 + $0x20] sm:$0xff]
        %v640 = vld [vmem:[%s634 + $0x28] sm:$0xff]
        %v641 = vld [vmem:[%s634 + $0x30] sm:$0xff]
        %v642 = vld [vmem:[%s634 + $0x38] sm:$0xff]
        %v643 = vld [vmem:[%s634 + $0x40] sm:$0xff]
        %v644 = vld [vmem:[%s634 + $0x48] sm:$0xff]
        %v645 = vld [vmem:[%s634 + $0x50] sm:$0xff]
        %v646 = vld [vmem:[%s634 + $0x58] sm:$0xff]
        %v647 = vld [vmem:[%s634 + $0x60] sm:$0xff]
        %v648 = vld [vmem:[%s634 + $0x68] sm:$0xff]
        %v649 = vld [vmem:[%s634 + $0x70] sm:$0xff]
        %v650 = vld [vmem:[%s634 + $0x78] sm:$0xff]
        %v651 = vld [vmem:[%s634 + $0x80] sm:$0xff]
        %v652 = vld [vmem:[%s634 + $0x88] sm:$0xff]
        %v653 = vld [vmem:[%s634 + $0x90] sm:$0xff]
        %v654 = vld [vmem:[%s634 + $0x98] sm:$0xff]
        %v655 = vld [vmem:[%s634 + $0xa0] sm:$0xff]
        %v656 = vld [vmem:[%s634 + $0xa8] sm:$0xff]
        %v657 = vld [vmem:[%s634 + $0xb0] sm:$0xff]
        %v658 = vld [vmem:[%s634 + $0xb8] sm:$0xff]
        %v659 = vld [vmem:[%s634 + $0xc0] sm:$0xff]
        %v660 = vld [vmem:[%s634 + $0xc8] sm:$0xff]
        %v661 = vld [vmem:[%s634 + $0xd0] sm:$0xff]
        %v662 = vld [vmem:[%s634 + $0xd8] sm:$0xff]
        %v663 = vld [vmem:[%s634 + $0xe0] sm:$0xff]
        %v664 = vld [vmem:[%s634 + $0xe8] sm:$0xff]
        %v665 = vld [vmem:[%s634 + $0xf0] sm:$0xff]
        %v666 = vld [vmem:[%s634 + $0xf8] sm:$0xff]
        %v667 = vld [vmem:[%s634 + $0x100] sm:$0xff]
        %v668 = vld [vmem:[%s634 + $0x108] sm:$0xff]
        %v669 = vld [vmem:[%s634 + $0x110] sm:$0xff]
        %v670 = vld [vmem:[%s634 + $0x118] sm:$0xff]
        %v671 = vld [vmem:[%s634 + $0x120] sm:$0xff]
        %v672 = vld [vmem:[%s634 + $0x128] sm:$0xff]
        %v673 = vld [vmem:[%s634 + $0x130] sm:$0xff]
        %v674 = vld [vmem:[%s634 + $0x138] sm:$0xff]
        %v675 = vld [vmem:[%s634 + $0x140] sm:$0xff]
        %v676 = vld [vmem:[%s634 + $0x148] sm:$0xff]
        %v677 = vld [vmem:[%s634 + $0x150] sm:$0xff]
        %v678 = vld [vmem:[%s634 + $0x158] sm:$0xff]
        %v679 = vld [vmem:[%s634 + $0x160] sm:$0xff]
        %v680 = vld [vmem:[%s634 + $0x168] sm:$0xff]
        %v681 = vld [vmem:[%s634 + $0x170] sm:$0xff]
        %v682 = vld [vmem:[%s634 + $0x178] sm:$0xff]
        %v683 = vld [vmem:[%s634 + $0x180] sm:$0xff]
        %v684 = vld [vmem:[%s634 + $0x188] sm:$0xff]
        %v685 = vld [vmem:[%s634 + $0x190] sm:$0xff]
        %v686 = vld [vmem:[%s634 + $0x198] sm:$0xff]
        %v687 = vld [vmem:[%s634 + $0x1a0] sm:$0xff]
        %v688 = vld [vmem:[%s634 + $0x1a8] sm:$0xff]
        %v689 = vld [vmem:[%s634 + $0x1b0] sm:$0xff]
        %v690 = vld [vmem:[%s634 + $0x1b8] sm:$0xff]
        %v691 = vld [vmem:[%s634 + $0x1c0] sm:$0xff]
        %v692 = vld [vmem:[%s634 + $0x1c8] sm:$0xff]
        %v693 = vld [vmem:[%s634 + $0x1d0] sm:$0xff]
        %v694 = vld [vmem:[%s634 + $0x1d8] sm:$0xff]
        %v695 = vld [vmem:[%s634 + $0x1e0] sm:$0xff]
        %v696 = vld [vmem:[%s634 + $0x1e8] sm:$0xff]
        %v697 = vld [vmem:[%s634 + $0x1f0] sm:$0xff]
        %v698 = vld [vmem:[%s634 + $0x1f8] sm:$0xff]
        %699 = vmatprep.subr.mxu0 %v666
        %700 = vmatpush1.msra.mxu0 %v665
        %701 = vmatprep.subr.mxu0 %v664
        %702 = vmatpush1.msra.mxu0 %v663
        %703 = vmatprep.subr.mxu0 %v662
        %704 = vmatpush1.msra.mxu0 %v661
        %705 = vmatprep.subr.mxu0 %v660
        %706 = vmatpush1.msra.mxu0 %v659
        %707 = vmatprep.subr.mxu0 %v658
        %708 = vmatpush1.msra.mxu0 %v657
        %709 = vmatprep.subr.mxu0 %v656
        %710 = vmatpush1.msra.mxu0 %v655
        %711 = vmatprep.subr.mxu0 %v654
        %712 = vmatpush1.msra.mxu0 %v653
        %713 = vmatprep.subr.mxu0 %v652
        %714 = vmatpush1.msra.mxu0 %v651
        %715 = vmatprep.subr.mxu0 %v650
        %716 = vmatpush1.msra.mxu0 %v649
        %717 = vmatprep.subr.mxu0 %v648
        %718 = vmatpush1.msra.mxu0 %v647
        %719 = vmatprep.subr.mxu0 %v646
        %720 = vmatpush1.msra.mxu0 %v645
        %721 = vmatprep.subr.mxu0 %v644
        %722 = vmatpush1.msra.mxu0 %v643
        %723 = vmatprep.subr.mxu0 %v642
        %724 = vmatpush1.msra.mxu0 %v641
        %725 = vmatprep.subr.mxu0 %v640
        %726 = vmatpush1.msra.mxu0 %v639
        %727 = vmatprep.subr.mxu0 %v638
        %728 = vmatpush1.msra.mxu0 %v637
        %729 = vmatprep.subr.mxu0 %v636
        %730 = vmatpush1.msra.mxu0 %v635
        %731 = vmatprep.subr.mxu0 %v698
        %732 = vmatpush2.msra.mxu0 %v697
        %733 = vmatprep.subr.mxu0 %v696
        %734 = vmatpush2.msra.mxu0 %v695
        %735 = vmatprep.subr.mxu0 %v694
        %736 = vmatpush2.msra.mxu0 %v693
        %737 = vmatprep.subr.mxu0 %v692
        %738 = vmatpush2.msra.mxu0 %v691
        %739 = vmatprep.subr.mxu0 %v690
        %740 = vmatpush2.msra.mxu0 %v689
        %741 = vmatprep.subr.mxu0 %v688
        %742 = vmatpush2.msra.mxu0 %v687
        %743 = vmatprep.subr.mxu0 %v686
        %744 = vmatpush2.msra.mxu0 %v685
        %745 = vmatprep.subr.mxu0 %v684
        %746 = vmatpush2.msra.mxu0 %v683
        %747 = vmatprep.subr.mxu0 %v682
        %748 = vmatpush2.msra.mxu0 %v681
        %749 = vmatprep.subr.mxu0 %v680
        %750 = vmatpush2.msra.mxu0 %v679
        %751 = vmatprep.subr.mxu0 %v678
        %752 = vmatpush2.msra.mxu0 %v677
        %753 = vmatprep.subr.mxu0 %v676
        %754 = vmatpush2.msra.mxu0 %v675
        %755 = vmatprep.subr.mxu0 %v674
        %756 = vmatpush2.msra.mxu0 %v673
        %757 = vmatprep.subr.mxu0 %v672
        %758 = vmatpush2.msra.mxu0 %v671
        %759 = vmatprep.subr.mxu0 %v670
        %760 = vmatpush2.msra.mxu0 %v669
        %761 = vmatprep.subr.mxu0 %v668
        %762 = vmatpush2.msra.mxu0 %v667
        %763 = vmatprep.mubr.f32.mxu0 %v330
        %764 = vmatmul.mubr.f32.gmra.mxu0 %v329
        %v765 = vpop.f32.mrf.mxu0
        %v766 = vadd.f32 0.0, %v765
        %v767 = vpop.f32.mrf.mxu0
        %v768 = vadd.f32 0.0, %v767
        %769 = vmatprep.mubr.f32.mxu0 %v332
        %770 = vmatmul.mubr.f32.gmra.mxu0 %v331
        %v771 = vpop.f32.mrf.mxu0
        %v772 = vadd.f32 0.0, %v771
        %v773 = vpop.f32.mrf.mxu0
        %v774 = vadd.f32 0.0, %v773
        %775 = vdwg.mxu0
        %776 = vmatprep.subr.mxu0 %v601
        %777 = vmatpush1.msra.mxu0 %v600
        %778 = vmatprep.subr.mxu0 %v599
        %779 = vmatpush1.msra.mxu0 %v598
        %780 = vmatprep.subr.mxu0 %v597
        %781 = vmatpush1.msra.mxu0 %v596
        %782 = vmatprep.subr.mxu0 %v595
        %783 = vmatpush1.msra.mxu0 %v594
        %784 = vmatprep.subr.mxu0 %v593
        %785 = vmatpush1.msra.mxu0 %v592
        %786 = vmatprep.subr.mxu0 %v591
        %787 = vmatpush1.msra.mxu0 %v590
        %788 = vmatprep.subr.mxu0 %v589
        %789 = vmatpush1.msra.mxu0 %v588
        %790 = vmatprep.subr.mxu0 %v587
        %791 = vmatpush1.msra.mxu0 %v586
        %792 = vmatprep.subr.mxu0 %v585
        %793 = vmatpush1.msra.mxu0 %v584
        %794 = vmatprep.subr.mxu0 %v583
        %795 = vmatpush1.msra.mxu0 %v582
        %796 = vmatprep.subr.mxu0 %v581
        %797 = vmatpush1.msra.mxu0 %v580
        %798 = vmatprep.subr.mxu0 %v579
        %799 = vmatpush1.msra.mxu0 %v578
        %800 = vmatprep.subr.mxu0 %v577
        %801 = vmatpush1.msra.mxu0 %v576
        %802 = vmatprep.subr.mxu0 %v575
        %803 = vmatpush1.msra.mxu0 %v574
        %804 = vmatprep.subr.mxu0 %v573
        %805 = vmatpush1.msra.mxu0 %v572
        %806 = vmatprep.subr.mxu0 %v571
        %807 = vmatpush1.msra.mxu0 %v570
        %808 = vmatprep.subr.mxu0 %v633
        %809 = vmatpush2.msra.mxu0 %v632
        %810 = vmatprep.subr.mxu0 %v631
        %811 = vmatpush2.msra.mxu0 %v630
        %812 = vmatprep.subr.mxu0 %v629
        %813 = vmatpush2.msra.mxu0 %v628
        %814 = vmatprep.subr.mxu0 %v627
        %815 = vmatpush2.msra.mxu0 %v626
        %816 = vmatprep.subr.mxu0 %v625
        %817 = vmatpush2.msra.mxu0 %v624
        %818 = vmatprep.subr.mxu0 %v623
        %819 = vmatpush2.msra.mxu0 %v622
        %820 = vmatprep.subr.mxu0 %v621
        %821 = vmatpush2.msra.mxu0 %v620
        %822 = vmatprep.subr.mxu0 %v619
        %823 = vmatpush2.msra.mxu0 %v618
        %824 = vmatprep.subr.mxu0 %v617
        %825 = vmatpush2.msra.mxu0 %v616
        %826 = vmatprep.subr.mxu0 %v615
        %827 = vmatpush2.msra.mxu0 %v614
        %828 = vmatprep.subr.mxu0 %v613
        %829 = vmatpush2.msra.mxu0 %v612
        %830 = vmatprep.subr.mxu0 %v611
        %831 = vmatpush2.msra.mxu0 %v610
        %832 = vmatprep.subr.mxu0 %v609
        %833 = vmatpush2.msra.mxu0 %v608
        %834 = vmatprep.subr.mxu0 %v607
        %835 = vmatpush2.msra.mxu0 %v606
        %836 = vmatprep.subr.mxu0 %v605
        %837 = vmatpush2.msra.mxu0 %v604
        %838 = vmatprep.subr.mxu0 %v603
        %839 = vmatpush2.msra.mxu0 %v602
        %840 = vmatprep.mubr.f32.mxu0 %v479
        %841 = vmatmul.mubr.f32.gmra.mxu0 %v477
        %v842 = vpop.f32.mrf.mxu0
        %v843 = vadd.f32 %v766, %v842
        %v844 = vpop.f32.mrf.mxu0
        %v845 = vadd.f32 %v768, %v844
        %846 = vmatprep.mubr.f32.mxu0 %v485
        %847 = vmatmul.mubr.f32.gmra.mxu0 %v483
        %v848 = vpop.f32.mrf.mxu0
        %v849 = vadd.f32 %v772, %v848
        %v850 = vpop.f32.mrf.mxu0
        %v851 = vadd.f32 %v774, %v850
        %852 = vdwg.mxu0
        %s853 = scalar_lea.vmem [#allocation6], 1024
        %v854 = vld [vmem:[%s853] sm:$0xff]
        %v855 = vld [vmem:[%s853 + $0x8] sm:$0xff]
        %v856 = vld [vmem:[%s853 + $0x10] sm:$0xff]
        %v857 = vld [vmem:[%s853 + $0x18] sm:$0xff]
        %v858 = vld [vmem:[%s853 + $0x20] sm:$0xff]
        %v859 = vld [vmem:[%s853 + $0x28] sm:$0xff]
        %v860 = vld [vmem:[%s853 + $0x30] sm:$0xff]
        %v861 = vld [vmem:[%s853 + $0x38] sm:$0xff]
        %v862 = vld [vmem:[%s853 + $0x40] sm:$0xff]
        %v863 = vld [vmem:[%s853 + $0x48] sm:$0xff]
        %v864 = vld [vmem:[%s853 + $0x50] sm:$0xff]
        %v865 = vld [vmem:[%s853 + $0x58] sm:$0xff]
        %v866 = vld [vmem:[%s853 + $0x60] sm:$0xff]
        %v867 = vld [vmem:[%s853 + $0x68] sm:$0xff]
        %v868 = vld [vmem:[%s853 + $0x70] sm:$0xff]
        %v869 = vld [vmem:[%s853 + $0x78] sm:$0xff]
        %v870 = vld [vmem:[%s853 + $0x80] sm:$0xff]
        %v871 = vld [vmem:[%s853 + $0x88] sm:$0xff]
        %v872 = vld [vmem:[%s853 + $0x90] sm:$0xff]
        %v873 = vld [vmem:[%s853 + $0x98] sm:$0xff]
        %v874 = vld [vmem:[%s853 + $0xa0] sm:$0xff]
        %v875 = vld [vmem:[%s853 + $0xa8] sm:$0xff]
        %v876 = vld [vmem:[%s853 + $0xb0] sm:$0xff]
        %v877 = vld [vmem:[%s853 + $0xb8] sm:$0xff]
        %v878 = vld [vmem:[%s853 + $0xc0] sm:$0xff]
        %v879 = vld [vmem:[%s853 + $0xc8] sm:$0xff]
        %v880 = vld [vmem:[%s853 + $0xd0] sm:$0xff]
        %v881 = vld [vmem:[%s853 + $0xd8] sm:$0xff]
        %v882 = vld [vmem:[%s853 + $0xe0] sm:$0xff]
        %v883 = vld [vmem:[%s853 + $0xe8] sm:$0xff]
        %v884 = vld [vmem:[%s853 + $0xf0] sm:$0xff]
        %v885 = vld [vmem:[%s853 + $0xf8] sm:$0xff]
        %v886 = vld [vmem:[%s853 + $0x100] sm:$0xff]
        %v887 = vld [vmem:[%s853 + $0x108] sm:$0xff]
        %v888 = vld [vmem:[%s853 + $0x110] sm:$0xff]
        %v889 = vld [vmem:[%s853 + $0x118] sm:$0xff]
        %v890 = vld [vmem:[%s853 + $0x120] sm:$0xff]
        %v891 = vld [vmem:[%s853 + $0x128] sm:$0xff]
        %v892 = vld [vmem:[%s853 + $0x130] sm:$0xff]
        %v893 = vld [vmem:[%s853 + $0x138] sm:$0xff]
        %v894 = vld [vmem:[%s853 + $0x140] sm:$0xff]
        %v895 = vld [vmem:[%s853 + $0x148] sm:$0xff]
        %v896 = vld [vmem:[%s853 + $0x150] sm:$0xff]
        %v897 = vld [vmem:[%s853 + $0x158] sm:$0xff]
        %v898 = vld [vmem:[%s853 + $0x160] sm:$0xff]
        %v899 = vld [vmem:[%s853 + $0x168] sm:$0xff]
        %v900 = vld [vmem:[%s853 + $0x170] sm:$0xff]
        %v901 = vld [vmem:[%s853 + $0x178] sm:$0xff]
        %v902 = vld [vmem:[%s853 + $0x180] sm:$0xff]
        %v903 = vld [vmem:[%s853 + $0x188] sm:$0xff]
        %v904 = vld [vmem:[%s853 + $0x190] sm:$0xff]
        %v905 = vld [vmem:[%s853 + $0x198] sm:$0xff]
        %v906 = vld [vmem:[%s853 + $0x1a0] sm:$0xff]
        %v907 = vld [vmem:[%s853 + $0x1a8] sm:$0xff]
        %v908 = vld [vmem:[%s853 + $0x1b0] sm:$0xff]
        %v909 = vld [vmem:[%s853 + $0x1b8] sm:$0xff]
        %v910 = vld [vmem:[%s853 + $0x1c0] sm:$0xff]
        %v911 = vld [vmem:[%s853 + $0x1c8] sm:$0xff]
        %v912 = vld [vmem:[%s853 + $0x1d0] sm:$0xff]
        %v913 = vld [vmem:[%s853 + $0x1d8] sm:$0xff]
        %v914 = vld [vmem:[%s853 + $0x1e0] sm:$0xff]
        %v915 = vld [vmem:[%s853 + $0x1e8] sm:$0xff]
        %v916 = vld [vmem:[%s853 + $0x1f0] sm:$0xff]
        %v917 = vld [vmem:[%s853 + $0x1f8] sm:$0xff]
        %918 = vmatprep.subr.mxu0 %v885
        %919 = vmatpush1.msra.mxu0 %v884
        %920 = vmatprep.subr.mxu0 %v883
        %921 = vmatpush1.msra.mxu0 %v882
        %922 = vmatprep.subr.mxu0 %v881
        %923 = vmatpush1.msra.mxu0 %v880
        %924 = vmatprep.subr.mxu0 %v879
        %925 = vmatpush1.msra.mxu0 %v878
        %926 = vmatprep.subr.mxu0 %v877
        %927 = vmatpush1.msra.mxu0 %v876
        %928 = vmatprep.subr.mxu0 %v875
        %929 = vmatpush1.msra.mxu0 %v874
        %930 = vmatprep.subr.mxu0 %v873
        %931 = vmatpush1.msra.mxu0 %v872
        %932 = vmatprep.subr.mxu0 %v871
        %933 = vmatpush1.msra.mxu0 %v870
        %934 = vmatprep.subr.mxu0 %v869
        %935 = vmatpush1.msra.mxu0 %v868
        %936 = vmatprep.subr.mxu0 %v867
        %937 = vmatpush1.msra.mxu0 %v866
        %938 = vmatprep.subr.mxu0 %v865
        %939 = vmatpush1.msra.mxu0 %v864
        %940 = vmatprep.subr.mxu0 %v863
        %941 = vmatpush1.msra.mxu0 %v862
        %942 = vmatprep.subr.mxu0 %v861
        %943 = vmatpush1.msra.mxu0 %v860
        %944 = vmatprep.subr.mxu0 %v859
        %945 = vmatpush1.msra.mxu0 %v858
        %946 = vmatprep.subr.mxu0 %v857
        %947 = vmatpush1.msra.mxu0 %v856
        %948 = vmatprep.subr.mxu0 %v855
        %949 = vmatpush1.msra.mxu0 %v854
        %950 = vmatprep.subr.mxu0 %v917
        %951 = vmatpush2.msra.mxu0 %v916
        %952 = vmatprep.subr.mxu0 %v915
        %953 = vmatpush2.msra.mxu0 %v914
        %954 = vmatprep.subr.mxu0 %v913
        %955 = vmatpush2.msra.mxu0 %v912
        %956 = vmatprep.subr.mxu0 %v911
        %957 = vmatpush2.msra.mxu0 %v910
        %958 = vmatprep.subr.mxu0 %v909
        %959 = vmatpush2.msra.mxu0 %v908
        %960 = vmatprep.subr.mxu0 %v907
        %961 = vmatpush2.msra.mxu0 %v906
        %962 = vmatprep.subr.mxu0 %v905
        %963 = vmatpush2.msra.mxu0 %v904
        %964 = vmatprep.subr.mxu0 %v903
        %965 = vmatpush2.msra.mxu0 %v902
        %966 = vmatprep.subr.mxu0 %v901
        %967 = vmatpush2.msra.mxu0 %v900
        %968 = vmatprep.subr.mxu0 %v899
        %969 = vmatpush2.msra.mxu0 %v898
        %970 = vmatprep.subr.mxu0 %v897
        %971 = vmatpush2.msra.mxu0 %v896
        %972 = vmatprep.subr.mxu0 %v895
        %973 = vmatpush2.msra.mxu0 %v894
        %974 = vmatprep.subr.mxu0 %v893
        %975 = vmatpush2.msra.mxu0 %v892
        %976 = vmatprep.subr.mxu0 %v891
        %977 = vmatpush2.msra.mxu0 %v890
        %978 = vmatprep.subr.mxu0 %v889
        %979 = vmatpush2.msra.mxu0 %v888
        %980 = vmatprep.subr.mxu0 %v887
        %981 = vmatpush2.msra.mxu0 %v886
        %982 = vmatprep.mubr.f32.mxu0 %v562
        %983 = vmatmul.mubr.f32.gmra.mxu0 %v560
        %v984 = vpop.f32.mrf.mxu0
        %v985 = vadd.f32 0.0, %v984
        %v986 = vpop.f32.mrf.mxu0
        %v987 = vadd.f32 0.0, %v986
        %988 = vmatprep.mubr.f32.mxu0 %v568
        %989 = vmatmul.mubr.f32.gmra.mxu0 %v566
        %v990 = vpop.f32.mrf.mxu0
        %v991 = vadd.f32 0.0, %v990
        %v992 = vpop.f32.mrf.mxu0
        %v993 = vadd.f32 0.0, %v992
        %994 = vdwg.mxu0
        %v995 = vadd.f32 %v843, %v985
        %v996 = vadd.f32 %v845, %v987
        %v997 = vadd.f32 %v849, %v991
        %v998 = vadd.f32 %v851, %v993
        %999 = vmatprep.subr.mxu0 %v364
        %1000 = vmatpush1.msra.mxu0 %v363
        %1001 = vmatprep.subr.mxu0 %v362
        %1002 = vmatpush1.msra.mxu0 %v361
        %1003 = vmatprep.subr.mxu0 %v360
        %1004 = vmatpush1.msra.mxu0 %v359
        %1005 = vmatprep.subr.mxu0 %v358
        %1006 = vmatpush1.msra.mxu0 %v357
        %1007 = vmatprep.subr.mxu0 %v356
        %1008 = vmatpush1.msra.mxu0 %v355
        %1009 = vmatprep.subr.mxu0 %v354
        %1010 = vmatpush1.msra.mxu0 %v353
        %1011 = vmatprep.subr.mxu0 %v352
        %1012 = vmatpush1.msra.mxu0 %v351
        %1013 = vmatprep.subr.mxu0 %v350
        %1014 = vmatpush1.msra.mxu0 %v349
        %1015 = vmatprep.subr.mxu0 %v348
        %1016 = vmatpush1.msra.mxu0 %v347
        %1017 = vmatprep.subr.mxu0 %v346
        %1018 = vmatpush1.msra.mxu0 %v345
        %1019 = vmatprep.subr.mxu0 %v344
        %1020 = vmatpush1.msra.mxu0 %v343
        %1021 = vmatprep.subr.mxu0 %v342
        %1022 = vmatpush1.msra.mxu0 %v341
        %1023 = vmatprep.subr.mxu0 %v340
        %1024 = vmatpush1.msra.mxu0 %v339
        %1025 = vmatprep.subr.mxu0 %v338
        %1026 = vmatpush1.msra.mxu0 %v337
        %1027 = vmatprep.subr.mxu0 %v336
        %1028 = vmatpush1.msra.mxu0 %v335
        %1029 = vmatprep.subr.mxu0 %v334
        %1030 = vmatpush1.msra.mxu0 %v333
        %1031 = vmatprep.subr.mxu0 %v396
        %1032 = vmatpush2.msra.mxu0 %v395
        %1033 = vmatprep.subr.mxu0 %v394
        %1034 = vmatpush2.msra.mxu0 %v393
        %1035 = vmatprep.subr.mxu0 %v392
        %1036 = vmatpush2.msra.mxu0 %v391
        %1037 = vmatprep.subr.mxu0 %v390
        %1038 = vmatpush2.msra.mxu0 %v389
        %1039 = vmatprep.subr.mxu0 %v388
        %1040 = vmatpush2.msra.mxu0 %v387
        %1041 = vmatprep.subr.mxu0 %v386
        %1042 = vmatpush2.msra.mxu0 %v385
        %1043 = vmatprep.subr.mxu0 %v384
        %1044 = vmatpush2.msra.mxu0 %v383
        %1045 = vmatprep.subr.mxu0 %v382
        %1046 = vmatpush2.msra.mxu0 %v381
        %1047 = vmatprep.subr.mxu0 %v380
        %1048 = vmatpush2.msra.mxu0 %v379
        %1049 = vmatprep.subr.mxu0 %v378
        %1050 = vmatpush2.msra.mxu0 %v377
        %1051 = vmatprep.subr.mxu0 %v376
        %1052 = vmatpush2.msra.mxu0 %v375
        %1053 = vmatprep.subr.mxu0 %v374
        %1054 = vmatpush2.msra.mxu0 %v373
        %1055 = vmatprep.subr.mxu0 %v372
        %1056 = vmatpush2.msra.mxu0 %v371
        %1057 = vmatprep.subr.mxu0 %v370
        %1058 = vmatpush2.msra.mxu0 %v369
        %1059 = vmatprep.subr.mxu0 %v368
        %1060 = vmatpush2.msra.mxu0 %v367
        %1061 = vmatprep.subr.mxu0 %v366
        %1062 = vmatpush2.msra.mxu0 %v365
        %1063 = vmatprep.mubr.f32.mxu0 %v996
        %1064 = vmatmul.mubr.f32.gmra.mxu0 %v995
        %v1065 = vpop.f32.mrf.mxu0
        %v1066 = vadd.f32 0.0, %v1065
        %v1067 = vpop.f32.mrf.mxu0
        %v1068 = vadd.f32 0.0, %v1067
        %1069 = vmatprep.mubr.f32.mxu0 %v998
        %1070 = vmatmul.mubr.f32.gmra.mxu0 %v997
        %v1071 = vpop.f32.mrf.mxu0
        %v1072 = vadd.f32 0.0, %v1071
        %v1073 = vpop.f32.mrf.mxu0
        %v1074 = vadd.f32 0.0, %v1073
        %1075 = vdwg.mxu0
        %v1076 = vmul.f32 %v995, %v995
        %v1077 = vmul.f32 %v996, %v996
        %v1078 = vmul.f32 %v997, %v997
        %v1079 = vmul.f32 %v998, %v998
        %1080 = vmatprep.subr.mxu0 %v364
        %1081 = vmatpush1.msra.mxu0 %v363
        %1082 = vmatprep.subr.mxu0 %v362
        %1083 = vmatpush1.msra.mxu0 %v361
        %1084 = vmatprep.subr.mxu0 %v360
        %1085 = vmatpush1.msra.mxu0 %v359
        %1086 = vmatprep.subr.mxu0 %v358
        %1087 = vmatpush1.msra.mxu0 %v357
        %1088 = vmatprep.subr.mxu0 %v356
        %1089 = vmatpush1.msra.mxu0 %v355
        %1090 = vmatprep.subr.mxu0 %v354
        %1091 = vmatpush1.msra.mxu0 %v353
        %1092 = vmatprep.subr.mxu0 %v352
        %1093 = vmatpush1.msra.mxu0 %v351
        %1094 = vmatprep.subr.mxu0 %v350
        %1095 = vmatpush1.msra.mxu0 %v349
        %1096 = vmatprep.subr.mxu0 %v348
        %1097 = vmatpush1.msra.mxu0 %v347
        %1098 = vmatprep.subr.mxu0 %v346
        %1099 = vmatpush1.msra.mxu0 %v345
        %1100 = vmatprep.subr.mxu0 %v344
        %1101 = vmatpush1.msra.mxu0 %v343
        %1102 = vmatprep.subr.mxu0 %v342
        %1103 = vmatpush1.msra.mxu0 %v341
        %1104 = vmatprep.subr.mxu0 %v340
        %1105 = vmatpush1.msra.mxu0 %v339
        %1106 = vmatprep.subr.mxu0 %v338
        %1107 = vmatpush1.msra.mxu0 %v337
        %1108 = vmatprep.subr.mxu0 %v336
        %1109 = vmatpush1.msra.mxu0 %v335
        %1110 = vmatprep.subr.mxu0 %v334
        %1111 = vmatpush1.msra.mxu0 %v333
        %1112 = vmatprep.subr.mxu0 %v396
        %1113 = vmatpush2.msra.mxu0 %v395
        %1114 = vmatprep.subr.mxu0 %v394
        %1115 = vmatpush2.msra.mxu0 %v393
        %1116 = vmatprep.subr.mxu0 %v392
        %1117 = vmatpush2.msra.mxu0 %v391
        %1118 = vmatprep.subr.mxu0 %v390
        %1119 = vmatpush2.msra.mxu0 %v389
        %1120 = vmatprep.subr.mxu0 %v388
        %1121 = vmatpush2.msra.mxu0 %v387
        %1122 = vmatprep.subr.mxu0 %v386
        %1123 = vmatpush2.msra.mxu0 %v385
        %1124 = vmatprep.subr.mxu0 %v384
        %1125 = vmatpush2.msra.mxu0 %v383
        %1126 = vmatprep.subr.mxu0 %v382
        %1127 = vmatpush2.msra.mxu0 %v381
        %1128 = vmatprep.subr.mxu0 %v380
        %1129 = vmatpush2.msra.mxu0 %v379
        %1130 = vmatprep.subr.mxu0 %v378
        %1131 = vmatpush2.msra.mxu0 %v377
        %1132 = vmatprep.subr.mxu0 %v376
        %1133 = vmatpush2.msra.mxu0 %v375
        %1134 = vmatprep.subr.mxu0 %v374
        %1135 = vmatpush2.msra.mxu0 %v373
        %1136 = vmatprep.subr.mxu0 %v372
        %1137 = vmatpush2.msra.mxu0 %v371
        %1138 = vmatprep.subr.mxu0 %v370
        %1139 = vmatpush2.msra.mxu0 %v369
        %1140 = vmatprep.subr.mxu0 %v368
        %1141 = vmatpush2.msra.mxu0 %v367
        %1142 = vmatprep.subr.mxu0 %v366
        %1143 = vmatpush2.msra.mxu0 %v365
        %1144 = vmatprep.mubr.f32.mxu0 %v1077
        %1145 = vmatmul.mubr.f32.gmra.mxu0 %v1076
        %v1146 = vpop.f32.mrf.mxu0
        %v1147 = vadd.f32 0.0, %v1146
        %v1148 = vpop.f32.mrf.mxu0
        %v1149 = vadd.f32 0.0, %v1148
        %1150 = vmatprep.mubr.f32.mxu0 %v1079
        %1151 = vmatmul.mubr.f32.gmra.mxu0 %v1078
        %v1152 = vpop.f32.mrf.mxu0
        %v1153 = vadd.f32 0.0, %v1152
        %v1154 = vpop.f32.mrf.mxu0
        %v1155 = vadd.f32 0.0, %v1154
        %1156 = vdwg.mxu0
        %v1157 = vadd.f32 %v1066, %v1072
        %v1158 = vrot.slane %v1157, 4
        %v1159 = vadd.f32 %v1157, %v1158
        %v1160 = vrot.slane %v1159, 2
        %v1161 = vadd.f32 %v1159, %v1160
        %v1162 = vrot.slane %v1161, 1
        %v1163 = vadd.f32 %v1161, %v1162
        %v1164 = vadd.f32 %v1068, %v1074
        %v1165 = vrot.slane %v1164, 4
        %v1166 = vadd.f32 %v1164, %v1165
        %v1167 = vrot.slane %v1166, 2
        %v1168 = vadd.f32 %v1166, %v1167
        %v1169 = vrot.slane %v1168, 1
        %v1170 = vadd.f32 %v1168, %v1169
        %v1171 = vmul.f32 %v1163, 0.00390625
        %v1172 = vmul.f32 %v1170, 0.00390625
        %v1173 = vadd.f32 %v1147, %v1153
        %v1174 = vrot.slane %v1173, 4
        %v1175 = vadd.f32 %v1173, %v1174
        %v1176 = vrot.slane %v1175, 2
        %v1177 = vadd.f32 %v1175, %v1176
        %v1178 = vrot.slane %v1177, 1
        %v1179 = vadd.f32 %v1177, %v1178
        %v1180 = vadd.f32 %v1149, %v1155
        %v1181 = vrot.slane %v1180, 4
        %v1182 = vadd.f32 %v1180, %v1181
        %v1183 = vrot.slane %v1182, 2
        %v1184 = vadd.f32 %v1182, %v1183
        %v1185 = vrot.slane %v1184, 1
        %v1186 = vadd.f32 %v1184, %v1185
        %v1187 = vmul.f32 %v1179, 0.00390625
        %v1188 = vmul.f32 %v1186, 0.00390625
        %v1189 = vmul.f32 %v1171, %v1171
        %v1190 = vmul.f32 %v1172, %v1172
        %v1191 = vsub.f32 %v1187, %v1189
        %v1192 = vsub.f32 %v1188, %v1190
        %v1193 = vmax.f32 %v1191, 0.0
        %v1194 = vmax.f32 %v1192, 0.0
        %v1195 = vsub.f32 %v995, %v1171
        %v1196 = vsub.f32 %v996, %v1172
        %v1197 = vsub.f32 %v997, %v1171
        %v1198 = vsub.f32 %v998, %v1172
        %v1199 = vadd.f32 %v1193, 1e-05
        %v1200 = vadd.f32 %v1194, 1e-05
        %v1201 = vrsqrt.pop %v1199
        %v1202 = vrsqrt.pop %v1200
        %v1203 = vmul.f32 %v1195, %v1201
        %v1204 = vmul.f32 %v1196, %v1202
        %v1205 = vmul.f32 %v1197, %v1201
        %v1206 = vmul.f32 %v1198, %v1202
        %v1207 = vmax.f32 %v1203, 0.0
        %v1208 = vmax.f32 %v1204, 0.0
        %v1209 = vmax.f32 %v1205, 0.0
        %v1210 = vmax.f32 %v1206, 0.0
        %1211 = vmatprep.subr.mxu0 0.0
        %1212 = vmatpush1.msra.mxu0 0.0
        %1213 = vmatprep.subr.mxu0 0.0
        %1214 = vmatpush1.msra.mxu0 0.0
        %1215 = vmatprep.subr.mxu0 0.0
        %1216 = vmatpush1.msra.mxu0 0.0
        %1217 = vmatprep.subr.mxu0 0.0
        %1218 = vmatpush1.msra.mxu0 0.0
        %1219 = vmatprep.subr.mxu0 0.0
        %1220 = vmatpush1.msra.mxu0 0.0
        %1221 = vmatprep.subr.mxu0 0.0
        %1222 = vmatpush1.msra.mxu0 0.0
        %1223 = vmatprep.subr.mxu0 0.0
        %1224 = vmatpush1.msra.mxu0 0.0
        %1225 = vmatprep.subr.mxu0 0.0
        %1226 = vmatpush1.msra.mxu0 0.0
        %1227 = vmatprep.subr.mxu0 0.0
        %1228 = vmatpush1.msra.mxu0 0.0
        %1229 = vmatprep.subr.mxu0 0.0
        %1230 = vmatpush1.msra.mxu0 0.0
        %1231 = vmatprep.subr.mxu0 0.0
        %1232 = vmatpush1.msra.mxu0 0.0
        %1233 = vmatprep.subr.mxu0 0.0
        %1234 = vmatpush1.msra.mxu0 0.0
        %1235 = vmatprep.subr.mxu0 0.0
        %1236 = vmatpush1.msra.mxu0 0.0
        %1237 = vmatprep.subr.mxu0 0.0
        %1238 = vmatpush1.msra.mxu0 0.0
        %1239 = vmatprep.subr.mxu0 %v1210
        %1240 = vmatpush1.msra.mxu0 %v1209
        %1241 = vmatprep.subr.mxu0 %v1208
        %1242 = vmatpush1.msra.mxu0 %v1207
        %1243 = vmatprep.subr.mxu0 0.0
        %1244 = vmatpush2.msra.mxu0 0.0
        %1245 = vmatprep.subr.mxu0 0.0
        %1246 = vmatpush2.msra.mxu0 0.0
        %1247 = vmatprep.subr.mxu0 0.0
        %1248 = vmatpush2.msra.mxu0 0.0
        %1249 = vmatprep.subr.mxu0 0.0
        %1250 = vmatpush2.msra.mxu0 0.0
        %1251 = vmatprep.subr.mxu0 0.0
        %1252 = vmatpush2.msra.mxu0 0.0
        %1253 = vmatprep.subr.mxu0 0.0
        %1254 = vmatpush2.msra.mxu0 0.0
        %1255 = vmatprep.subr.mxu0 0.0
        %1256 = vmatpush2.msra.mxu0 0.0
        %1257 = vmatprep.subr.mxu0 0.0
        %1258 = vmatpush2.msra.mxu0 0.0
        %1259 = vmatprep.subr.mxu0 0.0
        %1260 = vmatpush2.msra.mxu0 0.0
        %1261 = vmatprep.subr.mxu0 0.0
        %1262 = vmatpush2.msra.mxu0 0.0
        %1263 = vmatprep.subr.mxu0 0.0
        %1264 = vmatpush2.msra.mxu0 0.0
        %1265 = vmatprep.subr.mxu0 0.0
        %1266 = vmatpush2.msra.mxu0 0.0
        %1267 = vmatprep.subr.mxu0 0.0
        %1268 = vmatpush2.msra.mxu0 0.0
        %1269 = vmatprep.subr.mxu0 0.0
        %1270 = vmatpush2.msra.mxu0 0.0
        %1271 = vmatprep.subr.mxu0 0.0
        %1272 = vmatpush2.msra.mxu0 0.0
        %1273 = vmatprep.subr.mxu0 0.0
        %1274 = vmatpush2.msra.mxu0 0.0
        %1275 = vmatprep.mubr.f32.mxu0 0.0
        %1276 = vmatmul.mubr.f32.gmra.mxu0 %v405
        %v1277 = vpop.f32.mrf.mxu0
        %v1278 = vadd.f32 0.0, %v1277
        %v1279 = vpop.f32.mrf.mxu0
        %v1280 = vadd.f32 0.0, %v1279
        %1281 = vmatprep.mubr.f32.mxu0 0.0
        %1282 = vmatmul.mubr.f32.gmra.mxu0 %v408
        %v1283 = vpop.f32.mrf.mxu0
        %v1284 = vadd.f32 0.0, %v1283
        %v1285 = vpop.f32.mrf.mxu0
        %v1286 = vadd.f32 0.0, %v1285
        %1287 = vdwg.mxu0
        %1288 = vmatprep.subr.mxu0 0.0
        %1289 = vmatpush1.msra.mxu0 0.0
        %1290 = vmatprep.subr.mxu0 0.0
        %1291 = vmatpush1.msra.mxu0 0.0
        %1292 = vmatprep.subr.mxu0 0.0
        %1293 = vmatpush1.msra.mxu0 0.0
        %1294 = vmatprep.subr.mxu0 0.0
        %1295 = vmatpush1.msra.mxu0 0.0
        %1296 = vmatprep.subr.mxu0 0.0
        %1297 = vmatpush1.msra.mxu0 0.0
        %1298 = vmatprep.subr.mxu0 0.0
        %1299 = vmatpush1.msra.mxu0 0.0
        %1300 = vmatprep.subr.mxu0 0.0
        %1301 = vmatpush1.msra.mxu0 0.0
        %1302 = vmatprep.subr.mxu0 0.0
        %1303 = vmatpush1.msra.mxu0 0.0
        %1304 = vmatprep.subr.mxu0 0.0
        %1305 = vmatpush1.msra.mxu0 0.0
        %1306 = vmatprep.subr.mxu0 0.0
        %1307 = vmatpush1.msra.mxu0 0.0
        %1308 = vmatprep.subr.mxu0 0.0
        %1309 = vmatpush1.msra.mxu0 0.0
        %1310 = vmatprep.subr.mxu0 0.0
        %1311 = vmatpush1.msra.mxu0 0.0
        %1312 = vmatprep.subr.mxu0 0.0
        %1313 = vmatpush1.msra.mxu0 0.0
        %1314 = vmatprep.subr.mxu0 0.0
        %1315 = vmatpush1.msra.mxu0 0.0
        %1316 = vmatprep.subr.mxu0 %v1210
        %1317 = vmatpush1.msra.mxu0 %v1209
        %1318 = vmatprep.subr.mxu0 %v1208
        %1319 = vmatpush1.msra.mxu0 %v1207
        %1320 = vmatprep.subr.mxu0 0.0
        %1321 = vmatpush2.msra.mxu0 0.0
        %1322 = vmatprep.subr.mxu0 0.0
        %1323 = vmatpush2.msra.mxu0 0.0
        %1324 = vmatprep.subr.mxu0 0.0
        %1325 = vmatpush2.msra.mxu0 0.0
        %1326 = vmatprep.subr.mxu0 0.0
        %1327 = vmatpush2.msra.mxu0 0.0
        %1328 = vmatprep.subr.mxu0 0.0
        %1329 = vmatpush2.msra.mxu0 0.0
        %1330 = vmatprep.subr.mxu0 0.0
        %1331 = vmatpush2.msra.mxu0 0.0
        %1332 = vmatprep.subr.mxu0 0.0
        %1333 = vmatpush2.msra.mxu0 0.0
        %1334 = vmatprep.subr.mxu0 0.0
        %1335 = vmatpush2.msra.mxu0 0.0
        %1336 = vmatprep.subr.mxu0 0.0
        %1337 = vmatpush2.msra.mxu0 0.0
        %1338 = vmatprep.subr.mxu0 0.0
        %1339 = vmatpush2.msra.mxu0 0.0
        %1340 = vmatprep.subr.mxu0 0.0
        %1341 = vmatpush2.msra.mxu0 0.0
        %1342 = vmatprep.subr.mxu0 0.0
        %1343 = vmatpush2.msra.mxu0 0.0
        %1344 = vmatprep.subr.mxu0 0.0
        %1345 = vmatpush2.msra.mxu0 0.0
        %1346 = vmatprep.subr.mxu0 0.0
        %1347 = vmatpush2.msra.mxu0 0.0
        %1348 = vmatprep.subr.mxu0 0.0
        %1349 = vmatpush2.msra.mxu0 0.0
        %1350 = vmatprep.subr.mxu0 0.0
        %1351 = vmatpush2.msra.mxu0 0.0
        %1352 = vmatprep.mubr.f32.mxu0 0.0
        %1353 = vmatmul.mubr.f32.gmra.mxu0 %v488
        %v1354 = vpop.f32.mrf.mxu0
        %v1355 = vadd.f32 0.0, %v1354
        %v1356 = vpop.f32.mrf.mxu0
        %v1357 = vadd.f32 0.0, %v1356
        %1358 = vmatprep.mubr.f32.mxu0 0.0
        %1359 = vmatmul.mubr.f32.gmra.mxu0 %v491
        %v1360 = vpop.f32.mrf.mxu0
        %v1361 = vadd.f32 0.0, %v1360
        %v1362 = vpop.f32.mrf.mxu0
        %v1363 = vadd.f32 0.0, %v1362
        %1364 = vdwg.mxu0
        %v1365 = vld [vmem:[#allocation8] sm:$0xff]
        %v1366 = vld [vmem:[#allocation8 + $0x8] sm:$0xff]
        %v1367 = vld [vmem:[#allocation8 + $0x10] sm:$0xff]
        %v1368 = vld [vmem:[#allocation8 + $0x18] sm:$0xff]
        %v1369 = vld [vmem:[#allocation8 + $0x20] sm:$0xff]
        %v1370 = vld [vmem:[#allocation8 + $0x28] sm:$0xff]
        %v1371 = vld [vmem:[#allocation8 + $0x30] sm:$0xff]
        %v1372 = vld [vmem:[#allocation8 + $0x38] sm:$0xff]
        %v1373 = vld [vmem:[#allocation8 + $0x40] sm:$0xff]
        %v1374 = vld [vmem:[#allocation8 + $0x48] sm:$0xff]
        %v1375 = vld [vmem:[#allocation8 + $0x50] sm:$0xff]
        %v1376 = vld [vmem:[#allocation8 + $0x58] sm:$0xff]
        %v1377 = vld [vmem:[#allocation8 + $0x60] sm:$0xff]
        %v1378 = vld [vmem:[#allocation8 + $0x68] sm:$0xff]
        %v1379 = vld [vmem:[#allocation8 + $0x70] sm:$0xff]
        %v1380 = vld [vmem:[#allocation8 + $0x78] sm:$0xff]
        %v1381 = vld [vmem:[#allocation8 + $0x80] sm:$0xff]
        %v1382 = vld [vmem:[#allocation8 + $0x88] sm:$0xff]
        %v1383 = vld [vmem:[#allocation8 + $0x90] sm:$0xff]
        %v1384 = vld [vmem:[#allocation8 + $0x98] sm:$0xff]
        %v1385 = vld [vmem:[#allocation8 + $0xa0] sm:$0xff]
        %v1386 = vld [vmem:[#allocation8 + $0xa8] sm:$0xff]
        %v1387 = vld [vmem:[#allocation8 + $0xb0] sm:$0xff]
        %v1388 = vld [vmem:[#allocation8 + $0xb8] sm:$0xff]
        %v1389 = vld [vmem:[#allocation8 + $0xc0] sm:$0xff]
        %v1390 = vld [vmem:[#allocation8 + $0xc8] sm:$0xff]
        %v1391 = vld [vmem:[#allocation8 + $0xd0] sm:$0xff]
        %v1392 = vld [vmem:[#allocation8 + $0xd8] sm:$0xff]
        %v1393 = vld [vmem:[#allocation8 + $0xe0] sm:$0xff]
        %v1394 = vld [vmem:[#allocation8 + $0xe8] sm:$0xff]
        %v1395 = vld [vmem:[#allocation8 + $0xf0] sm:$0xff]
        %v1396 = vld [vmem:[#allocation8 + $0xf8] sm:$0xff]
        %v1397 = vld [vmem:[#allocation8 + $0x100] sm:$0xff]
        %v1398 = vld [vmem:[#allocation8 + $0x108] sm:$0xff]
        %v1399 = vld [vmem:[#allocation8 + $0x110] sm:$0xff]
        %v1400 = vld [vmem:[#allocation8 + $0x118] sm:$0xff]
        %v1401 = vld [vmem:[#allocation8 + $0x120] sm:$0xff]
        %v1402 = vld [vmem:[#allocation8 + $0x128] sm:$0xff]
        %v1403 = vld [vmem:[#allocation8 + $0x130] sm:$0xff]
        %v1404 = vld [vmem:[#allocation8 + $0x138] sm:$0xff]
        %v1405 = vld [vmem:[#allocation8 + $0x140] sm:$0xff]
        %v1406 = vld [vmem:[#allocation8 + $0x148] sm:$0xff]
        %v1407 = vld [vmem:[#allocation8 + $0x150] sm:$0xff]
        %v1408 = vld [vmem:[#allocation8 + $0x158] sm:$0xff]
        %v1409 = vld [vmem:[#allocation8 + $0x160] sm:$0xff]
        %v1410 = vld [vmem:[#allocation8 + $0x168] sm:$0xff]
        %v1411 = vld [vmem:[#allocation8 + $0x170] sm:$0xff]
        %v1412 = vld [vmem:[#allocation8 + $0x178] sm:$0xff]
        %v1413 = vld [vmem:[#allocation8 + $0x180] sm:$0xff]
        %v1414 = vld [vmem:[#allocation8 + $0x188] sm:$0xff]
        %v1415 = vld [vmem:[#allocation8 + $0x190] sm:$0xff]
        %v1416 = vld [vmem:[#allocation8 + $0x198] sm:$0xff]
        %v1417 = vld [vmem:[#allocation8 + $0x1a0] sm:$0xff]
        %v1418 = vld [vmem:[#allocation8 + $0x1a8] sm:$0xff]
        %v1419 = vld [vmem:[#allocation8 + $0x1b0] sm:$0xff]
        %v1420 = vld [vmem:[#allocation8 + $0x1b8] sm:$0xff]
        %v1421 = vld [vmem:[#allocation8 + $0x1c0] sm:$0xff]
        %v1422 = vld [vmem:[#allocation8 + $0x1c8] sm:$0xff]
        %v1423 = vld [vmem:[#allocation8 + $0x1d0] sm:$0xff]
        %v1424 = vld [vmem:[#allocation8 + $0x1d8] sm:$0xff]
        %v1425 = vld [vmem:[#allocation8 + $0x1e0] sm:$0xff]
        %v1426 = vld [vmem:[#allocation8 + $0x1e8] sm:$0xff]
        %v1427 = vld [vmem:[#allocation8 + $0x1f0] sm:$0xff]
        %v1428 = vld [vmem:[#allocation8 + $0x1f8] sm:$0xff]
        %s1429 = scalar_lea.vmem [#allocation8], 512
        %v1430 = vld [vmem:[%s1429] sm:$0xff]
        %v1431 = vld [vmem:[%s1429 + $0x8] sm:$0xff]
        %v1432 = vld [vmem:[%s1429 + $0x10] sm:$0xff]
        %v1433 = vld [vmem:[%s1429 + $0x18] sm:$0xff]
        %v1434 = vld [vmem:[%s1429 + $0x20] sm:$0xff]
        %v1435 = vld [vmem:[%s1429 + $0x28] sm:$0xff]
        %v1436 = vld [vmem:[%s1429 + $0x30] sm:$0xff]
        %v1437 = vld [vmem:[%s1429 + $0x38] sm:$0xff]
        %v1438 = vld [vmem:[%s1429 + $0x40] sm:$0xff]
        %v1439 = vld [vmem:[%s1429 + $0x48] sm:$0xff]
        %v1440 = vld [vmem:[%s1429 + $0x50] sm:$0xff]
        %v1441 = vld [vmem:[%s1429 + $0x58] sm:$0xff]
        %v1442 = vld [vmem:[%s1429 + $0x60] sm:$0xff]
        %v1443 = vld [vmem:[%s1429 + $0x68] sm:$0xff]
        %v1444 = vld [vmem:[%s1429 + $0x70] sm:$0xff]
        %v1445 = vld [vmem:[%s1429 + $0x78] sm:$0xff]
        %v1446 = vld [vmem:[%s1429 + $0x80] sm:$0xff]
        %v1447 = vld [vmem:[%s1429 + $0x88] sm:$0xff]
        %v1448 = vld [vmem:[%s1429 + $0x90] sm:$0xff]
        %v1449 = vld [vmem:[%s1429 + $0x98] sm:$0xff]
        %v1450 = vld [vmem:[%s1429 + $0xa0] sm:$0xff]
        %v1451 = vld [vmem:[%s1429 + $0xa8] sm:$0xff]
        %v1452 = vld [vmem:[%s1429 + $0xb0] sm:$0xff]
        %v1453 = vld [vmem:[%s1429 + $0xb8] sm:$0xff]
        %v1454 = vld [vmem:[%s1429 + $0xc0] sm:$0xff]
        %v1455 = vld [vmem:[%s1429 + $0xc8] sm:$0xff]
        %v1456 = vld [vmem:[%s1429 + $0xd0] sm:$0xff]
        %v1457 = vld [vmem:[%s1429 + $0xd8] sm:$0xff]
        %v1458 = vld [vmem:[%s1429 + $0xe0] sm:$0xff]
        %v1459 = vld [vmem:[%s1429 + $0xe8] sm:$0xff]
        %v1460 = vld [vmem:[%s1429 + $0xf0] sm:$0xff]
        %v1461 = vld [vmem:[%s1429 + $0xf8] sm:$0xff]
        %v1462 = vld [vmem:[%s1429 + $0x100] sm:$0xff]
        %v1463 = vld [vmem:[%s1429 + $0x108] sm:$0xff]
        %v1464 = vld [vmem:[%s1429 + $0x110] sm:$0xff]
        %v1465 = vld [vmem:[%s1429 + $0x118] sm:$0xff]
        %v1466 = vld [vmem:[%s1429 + $0x120] sm:$0xff]
        %v1467 = vld [vmem:[%s1429 + $0x128] sm:$0xff]
        %v1468 = vld [vmem:[%s1429 + $0x130] sm:$0xff]
        %v1469 = vld [vmem:[%s1429 + $0x138] sm:$0xff]
        %v1470 = vld [vmem:[%s1429 + $0x140] sm:$0xff]
        %v1471 = vld [vmem:[%s1429 + $0x148] sm:$0xff]
        %v1472 = vld [vmem:[%s1429 + $0x150] sm:$0xff]
        %v1473 = vld [vmem:[%s1429 + $0x158] sm:$0xff]
        %v1474 = vld [vmem:[%s1429 + $0x160] sm:$0xff]
        %v1475 = vld [vmem:[%s1429 + $0x168] sm:$0xff]
        %v1476 = vld [vmem:[%s1429 + $0x170] sm:$0xff]
        %v1477 = vld [vmem:[%s1429 + $0x178] sm:$0xff]
        %v1478 = vld [vmem:[%s1429 + $0x180] sm:$0xff]
        %v1479 = vld [vmem:[%s1429 + $0x188] sm:$0xff]
        %v1480 = vld [vmem:[%s1429 + $0x190] sm:$0xff]
        %v1481 = vld [vmem:[%s1429 + $0x198] sm:$0xff]
        %v1482 = vld [vmem:[%s1429 + $0x1a0] sm:$0xff]
        %v1483 = vld [vmem:[%s1429 + $0x1a8] sm:$0xff]
        %v1484 = vld [vmem:[%s1429 + $0x1b0] sm:$0xff]
        %v1485 = vld [vmem:[%s1429 + $0x1b8] sm:$0xff]
        %v1486 = vld [vmem:[%s1429 + $0x1c0] sm:$0xff]
        %v1487 = vld [vmem:[%s1429 + $0x1c8] sm:$0xff]
        %v1488 = vld [vmem:[%s1429 + $0x1d0] sm:$0xff]
        %v1489 = vld [vmem:[%s1429 + $0x1d8] sm:$0xff]
        %v1490 = vld [vmem:[%s1429 + $0x1e0] sm:$0xff]
        %v1491 = vld [vmem:[%s1429 + $0x1e8] sm:$0xff]
        %v1492 = vld [vmem:[%s1429 + $0x1f0] sm:$0xff]
        %v1493 = vld [vmem:[%s1429 + $0x1f8] sm:$0xff]
        %1494 = vmatprep.subr.mxu0 %v1461
        %1495 = vmatpush1.msra.mxu0 %v1460
        %1496 = vmatprep.subr.mxu0 %v1459
        %1497 = vmatpush1.msra.mxu0 %v1458
        %1498 = vmatprep.subr.mxu0 %v1457
        %1499 = vmatpush1.msra.mxu0 %v1456
        %1500 = vmatprep.subr.mxu0 %v1455
        %1501 = vmatpush1.msra.mxu0 %v1454
        %1502 = vmatprep.subr.mxu0 %v1453
        %1503 = vmatpush1.msra.mxu0 %v1452
        %1504 = vmatprep.subr.mxu0 %v1451
        %1505 = vmatpush1.msra.mxu0 %v1450
        %1506 = vmatprep.subr.mxu0 %v1449
        %1507 = vmatpush1.msra.mxu0 %v1448
        %1508 = vmatprep.subr.mxu0 %v1447
        %1509 = vmatpush1.msra.mxu0 %v1446
        %1510 = vmatprep.subr.mxu0 %v1445
        %1511 = vmatpush1.msra.mxu0 %v1444
        %1512 = vmatprep.subr.mxu0 %v1443
        %1513 = vmatpush1.msra.mxu0 %v1442
        %1514 = vmatprep.subr.mxu0 %v1441
        %1515 = vmatpush1.msra.mxu0 %v1440
        %1516 = vmatprep.subr.mxu0 %v1439
        %1517 = vmatpush1.msra.mxu0 %v1438
        %1518 = vmatprep.subr.mxu0 %v1437
        %1519 = vmatpush1.msra.mxu0 %v1436
        %1520 = vmatprep.subr.mxu0 %v1435
        %1521 = vmatpush1.msra.mxu0 %v1434
        %1522 = vmatprep.subr.mxu0 %v1433
        %1523 = vmatpush1.msra.mxu0 %v1432
        %1524 = vmatprep.subr.mxu0 %v1431
        %1525 = vmatpush1.msra.mxu0 %v1430
        %1526 = vmatprep.subr.mxu0 %v1493
        %1527 = vmatpush2.msra.mxu0 %v1492
        %1528 = vmatprep.subr.mxu0 %v1491
        %1529 = vmatpush2.msra.mxu0 %v1490
        %1530 = vmatprep.subr.mxu0 %v1489
        %1531 = vmatpush2.msra.mxu0 %v1488
        %1532 = vmatprep.subr.mxu0 %v1487
        %1533 = vmatpush2.msra.mxu0 %v1486
        %1534 = vmatprep.subr.mxu0 %v1485
        %1535 = vmatpush2.msra.mxu0 %v1484
        %1536 = vmatprep.subr.mxu0 %v1483
        %1537 = vmatpush2.msra.mxu0 %v1482
        %1538 = vmatprep.subr.mxu0 %v1481
        %1539 = vmatpush2.msra.mxu0 %v1480
        %1540 = vmatprep.subr.mxu0 %v1479
        %1541 = vmatpush2.msra.mxu0 %v1478
        %1542 = vmatprep.subr.mxu0 %v1477
        %1543 = vmatpush2.msra.mxu0 %v1476
        %1544 = vmatprep.subr.mxu0 %v1475
        %1545 = vmatpush2.msra.mxu0 %v1474
        %1546 = vmatprep.subr.mxu0 %v1473
        %1547 = vmatpush2.msra.mxu0 %v1472
        %1548 = vmatprep.subr.mxu0 %v1471
        %1549 = vmatpush2.msra.mxu0 %v1470
        %1550 = vmatprep.subr.mxu0 %v1469
        %1551 = vmatpush2.msra.mxu0 %v1468
        %1552 = vmatprep.subr.mxu0 %v1467
        %1553 = vmatpush2.msra.mxu0 %v1466
        %1554 = vmatprep.subr.mxu0 %v1465
        %1555 = vmatpush2.msra.mxu0 %v1464
        %1556 = vmatprep.subr.mxu0 %v1463
        %1557 = vmatpush2.msra.mxu0 %v1462
        %1558 = vmatprep.mubr.f32.mxu0 %v1208
        %1559 = vmatmul.mubr.f32.gmra.mxu0 %v1207
        %v1560 = vpop.f32.mrf.mxu0
        %v1561 = vadd.f32 0.0, %v1560
        %v1562 = vpop.f32.mrf.mxu0
        %v1563 = vadd.f32 0.0, %v1562
        %1564 = vmatprep.mubr.f32.mxu0 %v1210
        %1565 = vmatmul.mubr.f32.gmra.mxu0 %v1209
        %v1566 = vpop.f32.mrf.mxu0
        %v1567 = vadd.f32 0.0, %v1566
        %v1568 = vpop.f32.mrf.mxu0
        %v1569 = vadd.f32 0.0, %v1568
        %1570 = vdwg.mxu0
        %1571 = vmatprep.subr.mxu0 %v1396
        %1572 = vmatpush1.msra.mxu0 %v1395
        %1573 = vmatprep.subr.mxu0 %v1394
        %1574 = vmatpush1.msra.mxu0 %v1393
        %1575 = vmatprep.subr.mxu0 %v1392
        %1576 = vmatpush1.msra.mxu0 %v1391
        %1577 = vmatprep.subr.mxu0 %v1390
        %1578 = vmatpush1.msra.mxu0 %v1389
        %1579 = vmatprep.subr.mxu0 %v1388
        %1580 = vmatpush1.msra.mxu0 %v1387
        %1581 = vmatprep.subr.mxu0 %v1386
        %1582 = vmatpush1.msra.mxu0 %v1385
        %1583 = vmatprep.subr.mxu0 %v1384
        %1584 = vmatpush1.msra.mxu0 %v1383
        %1585 = vmatprep.subr.mxu0 %v1382
        %1586 = vmatpush1.msra.mxu0 %v1381
        %1587 = vmatprep.subr.mxu0 %v1380
        %1588 = vmatpush1.msra.mxu0 %v1379
        %1589 = vmatprep.subr.mxu0 %v1378
        %1590 = vmatpush1.msra.mxu0 %v1377
        %1591 = vmatprep.subr.mxu0 %v1376
        %1592 = vmatpush1.msra.mxu0 %v1375
        %1593 = vmatprep.subr.mxu0 %v1374
        %1594 = vmatpush1.msra.mxu0 %v1373
        %1595 = vmatprep.subr.mxu0 %v1372
        %1596 = vmatpush1.msra.mxu0 %v1371
        %1597 = vmatprep.subr.mxu0 %v1370
        %1598 = vmatpush1.msra.mxu0 %v1369
        %1599 = vmatprep.subr.mxu0 %v1368
        %1600 = vmatpush1.msra.mxu0 %v1367
        %1601 = vmatprep.subr.mxu0 %v1366
        %1602 = vmatpush1.msra.mxu0 %v1365
        %1603 = vmatprep.subr.mxu0 %v1428
        %1604 = vmatpush2.msra.mxu0 %v1427
        %1605 = vmatprep.subr.mxu0 %v1426
        %1606 = vmatpush2.msra.mxu0 %v1425
        %1607 = vmatprep.subr.mxu0 %v1424
        %1608 = vmatpush2.msra.mxu0 %v1423
        %1609 = vmatprep.subr.mxu0 %v1422
        %1610 = vmatpush2.msra.mxu0 %v1421
        %1611 = vmatprep.subr.mxu0 %v1420
        %1612 = vmatpush2.msra.mxu0 %v1419
        %1613 = vmatprep.subr.mxu0 %v1418
        %1614 = vmatpush2.msra.mxu0 %v1417
        %1615 = vmatprep.subr.mxu0 %v1416
        %1616 = vmatpush2.msra.mxu0 %v1415
        %1617 = vmatprep.subr.mxu0 %v1414
        %1618 = vmatpush2.msra.mxu0 %v1413
        %1619 = vmatprep.subr.mxu0 %v1412
        %1620 = vmatpush2.msra.mxu0 %v1411
        %1621 = vmatprep.subr.mxu0 %v1410
        %1622 = vmatpush2.msra.mxu0 %v1409
        %1623 = vmatprep.subr.mxu0 %v1408
        %1624 = vmatpush2.msra.mxu0 %v1407
        %1625 = vmatprep.subr.mxu0 %v1406
        %1626 = vmatpush2.msra.mxu0 %v1405
        %1627 = vmatprep.subr.mxu0 %v1404
        %1628 = vmatpush2.msra.mxu0 %v1403
        %1629 = vmatprep.subr.mxu0 %v1402
        %1630 = vmatpush2.msra.mxu0 %v1401
        %1631 = vmatprep.subr.mxu0 %v1400
        %1632 = vmatpush2.msra.mxu0 %v1399
        %1633 = vmatprep.subr.mxu0 %v1398
        %1634 = vmatpush2.msra.mxu0 %v1397
        %1635 = vmatprep.mubr.f32.mxu0 %v1280
        %1636 = vmatmul.mubr.f32.gmra.mxu0 %v1278
        %v1637 = vpop.f32.mrf.mxu0
        %v1638 = vadd.f32 %v1561, %v1637
        %v1639 = vpop.f32.mrf.mxu0
        %v1640 = vadd.f32 %v1563, %v1639
        %1641 = vmatprep.mubr.f32.mxu0 %v1286
        %1642 = vmatmul.mubr.f32.gmra.mxu0 %v1284
        %v1643 = vpop.f32.mrf.mxu0
        %v1644 = vadd.f32 %v1567, %v1643
        %v1645 = vpop.f32.mrf.mxu0
        %v1646 = vadd.f32 %v1569, %v1645
        %1647 = vdwg.mxu0
        %s1648 = scalar_lea.vmem [#allocation8], 1024
        %v1649 = vld [vmem:[%s1648] sm:$0xff]
        %v1650 = vld [vmem:[%s1648 + $0x8] sm:$0xff]
        %v1651 = vld [vmem:[%s1648 + $0x10] sm:$0xff]
        %v1652 = vld [vmem:[%s1648 + $0x18] sm:$0xff]
        %v1653 = vld [vmem:[%s1648 + $0x20] sm:$0xff]
        %v1654 = vld [vmem:[%s1648 + $0x28] sm:$0xff]
        %v1655 = vld [vmem:[%s1648 + $0x30] sm:$0xff]
        %v1656 = vld [vmem:[%s1648 + $0x38] sm:$0xff]
        %v1657 = vld [vmem:[%s1648 + $0x40] sm:$0xff]
        %v1658 = vld [vmem:[%s1648 + $0x48] sm:$0xff]
        %v1659 = vld [vmem:[%s1648 + $0x50] sm:$0xff]
        %v1660 = vld [vmem:[%s1648 + $0x58] sm:$0xff]
        %v1661 = vld [vmem:[%s1648 + $0x60] sm:$0xff]
        %v1662 = vld [vmem:[%s1648 + $0x68] sm:$0xff]
        %v1663 = vld [vmem:[%s1648 + $0x70] sm:$0xff]
        %v1664 = vld [vmem:[%s1648 + $0x78] sm:$0xff]
        %v1665 = vld [vmem:[%s1648 + $0x80] sm:$0xff]
        %v1666 = vld [vmem:[%s1648 + $0x88] sm:$0xff]
        %v1667 = vld [vmem:[%s1648 + $0x90] sm:$0xff]
        %v1668 = vld [vmem:[%s1648 + $0x98] sm:$0xff]
        %v1669 = vld [vmem:[%s1648 + $0xa0] sm:$0xff]
        %v1670 = vld [vmem:[%s1648 + $0xa8] sm:$0xff]
        %v1671 = vld [vmem:[%s1648 + $0xb0] sm:$0xff]
        %v1672 = vld [vmem:[%s1648 + $0xb8] sm:$0xff]
        %v1673 = vld [vmem:[%s1648 + $0xc0] sm:$0xff]
        %v1674 = vld [vmem:[%s1648 + $0xc8] sm:$0xff]
        %v1675 = vld [vmem:[%s1648 + $0xd0] sm:$0xff]
        %v1676 = vld [vmem:[%s1648 + $0xd8] sm:$0xff]
        %v1677 = vld [vmem:[%s1648 + $0xe0] sm:$0xff]
        %v1678 = vld [vmem:[%s1648 + $0xe8] sm:$0xff]
        %v1679 = vld [vmem:[%s1648 + $0xf0] sm:$0xff]
        %v1680 = vld [vmem:[%s1648 + $0xf8] sm:$0xff]
        %v1681 = vld [vmem:[%s1648 + $0x100] sm:$0xff]
        %v1682 = vld [vmem:[%s1648 + $0x108] sm:$0xff]
        %v1683 = vld [vmem:[%s1648 + $0x110] sm:$0xff]
        %v1684 = vld [vmem:[%s1648 + $0x118] sm:$0xff]
        %v1685 = vld [vmem:[%s1648 + $0x120] sm:$0xff]
        %v1686 = vld [vmem:[%s1648 + $0x128] sm:$0xff]
        %v1687 = vld [vmem:[%s1648 + $0x130] sm:$0xff]
        %v1688 = vld [vmem:[%s1648 + $0x138] sm:$0xff]
        %v1689 = vld [vmem:[%s1648 + $0x140] sm:$0xff]
        %v1690 = vld [vmem:[%s1648 + $0x148] sm:$0xff]
        %v1691 = vld [vmem:[%s1648 + $0x150] sm:$0xff]
        %v1692 = vld [vmem:[%s1648 + $0x158] sm:$0xff]
        %v1693 = vld [vmem:[%s1648 + $0x160] sm:$0xff]
        %v1694 = vld [vmem:[%s1648 + $0x168] sm:$0xff]
        %v1695 = vld [vmem:[%s1648 + $0x170] sm:$0xff]
        %v1696 = vld [vmem:[%s1648 + $0x178] sm:$0xff]
        %v1697 = vld [vmem:[%s1648 + $0x180] sm:$0xff]
        %v1698 = vld [vmem:[%s1648 + $0x188] sm:$0xff]
        %v1699 = vld [vmem:[%s1648 + $0x190] sm:$0xff]
        %v1700 = vld [vmem:[%s1648 + $0x198] sm:$0xff]
        %v1701 = vld [vmem:[%s1648 + $0x1a0] sm:$0xff]
        %v1702 = vld [vmem:[%s1648 + $0x1a8] sm:$0xff]
        %v1703 = vld [vmem:[%s1648 + $0x1b0] sm:$0xff]
        %v1704 = vld [vmem:[%s1648 + $0x1b8] sm:$0xff]
        %v1705 = vld [vmem:[%s1648 + $0x1c0] sm:$0xff]
        %v1706 = vld [vmem:[%s1648 + $0x1c8] sm:$0xff]
        %v1707 = vld [vmem:[%s1648 + $0x1d0] sm:$0xff]
        %v1708 = vld [vmem:[%s1648 + $0x1d8] sm:$0xff]
        %v1709 = vld [vmem:[%s1648 + $0x1e0] sm:$0xff]
        %v1710 = vld [vmem:[%s1648 + $0x1e8] sm:$0xff]
        %v1711 = vld [vmem:[%s1648 + $0x1f0] sm:$0xff]
        %v1712 = vld [vmem:[%s1648 + $0x1f8] sm:$0xff]
        %1713 = vmatprep.subr.mxu0 %v1680
        %1714 = vmatpush1.msra.mxu0 %v1679
        %1715 = vmatprep.subr.mxu0 %v1678
        %1716 = vmatpush1.msra.mxu0 %v1677
        %1717 = vmatprep.subr.mxu0 %v1676
        %1718 = vmatpush1.msra.mxu0 %v1675
        %1719 = vmatprep.subr.mxu0 %v1674
        %1720 = vmatpush1.msra.mxu0 %v1673
        %1721 = vmatprep.subr.mxu0 %v1672
        %1722 = vmatpush1.msra.mxu0 %v1671
        %1723 = vmatprep.subr.mxu0 %v1670
        %1724 = vmatpush1.msra.mxu0 %v1669
        %1725 = vmatprep.subr.mxu0 %v1668
        %1726 = vmatpush1.msra.mxu0 %v1667
        %1727 = vmatprep.subr.mxu0 %v1666
        %1728 = vmatpush1.msra.mxu0 %v1665
        %1729 = vmatprep.subr.mxu0 %v1664
        %1730 = vmatpush1.msra.mxu0 %v1663
        %1731 = vmatprep.subr.mxu0 %v1662
        %1732 = vmatpush1.msra.mxu0 %v1661
        %1733 = vmatprep.subr.mxu0 %v1660
        %1734 = vmatpush1.msra.mxu0 %v1659
        %1735 = vmatprep.subr.mxu0 %v1658
        %1736 = vmatpush1.msra.mxu0 %v1657
        %1737 = vmatprep.subr.mxu0 %v1656
        %1738 = vmatpush1.msra.mxu0 %v1655
        %1739 = vmatprep.subr.mxu0 %v1654
        %1740 = vmatpush1.msra.mxu0 %v1653
        %1741 = vmatprep.subr.mxu0 %v1652
        %1742 = vmatpush1.msra.mxu0 %v1651
        %1743 = vmatprep.subr.mxu0 %v1650
        %1744 = vmatpush1.msra.mxu0 %v1649
        %1745 = vmatprep.subr.mxu0 %v1712
        %1746 = vmatpush2.msra.mxu0 %v1711
        %1747 = vmatprep.subr.mxu0 %v1710
        %1748 = vmatpush2.msra.mxu0 %v1709
        %1749 = vmatprep.subr.mxu0 %v1708
        %1750 = vmatpush2.msra.mxu0 %v1707
        %1751 = vmatprep.subr.mxu0 %v1706
        %1752 = vmatpush2.msra.mxu0 %v1705
        %1753 = vmatprep.subr.mxu0 %v1704
        %1754 = vmatpush2.msra.mxu0 %v1703
        %1755 = vmatprep.subr.mxu0 %v1702
        %1756 = vmatpush2.msra.mxu0 %v1701
        %1757 = vmatprep.subr.mxu0 %v1700
        %1758 = vmatpush2.msra.mxu0 %v1699
        %1759 = vmatprep.subr.mxu0 %v1698
        %1760 = vmatpush2.msra.mxu0 %v1697
        %1761 = vmatprep.subr.mxu0 %v1696
        %1762 = vmatpush2.msra.mxu0 %v1695
        %1763 = vmatprep.subr.mxu0 %v1694
        %1764 = vmatpush2.msra.mxu0 %v1693
        %1765 = vmatprep.subr.mxu0 %v1692
        %1766 = vmatpush2.msra.mxu0 %v1691
        %1767 = vmatprep.subr.mxu0 %v1690
        %1768 = vmatpush2.msra.mxu0 %v1689
        %1769 = vmatprep.subr.mxu0 %v1688
        %1770 = vmatpush2.msra.mxu0 %v1687
        %1771 = vmatprep.subr.mxu0 %v1686
        %1772 = vmatpush2.msra.mxu0 %v1685
        %1773 = vmatprep.subr.mxu0 %v1684
        %1774 = vmatpush2.msra.mxu0 %v1683
        %1775 = vmatprep.subr.mxu0 %v1682
        %1776 = vmatpush2.msra.mxu0 %v1681
        %1777 = vmatprep.mubr.f32.mxu0 %v1357
        %1778 = vmatmul.mubr.f32.gmra.mxu0 %v1355
        %v1779 = vpop.f32.mrf.mxu0
        %v1780 = vadd.f32 0.0, %v1779
        %v1781 = vpop.f32.mrf.mxu0
        %v1782 = vadd.f32 0.0, %v1781
        %1783 = vmatprep.mubr.f32.mxu0 %v1363
        %1784 = vmatmul.mubr.f32.gmra.mxu0 %v1361
        %v1785 = vpop.f32.mrf.mxu0
        %v1786 = vadd.f32 0.0, %v1785
        %v1787 = vpop.f32.mrf.mxu0
        %v1788 = vadd.f32 0.0, %v1787
        %1789 = vdwg.mxu0
        %v1790 = vadd.f32 %v1638, %v1780
        %v1791 = vadd.f32 %v1640, %v1782
        %v1792 = vadd.f32 %v1644, %v1786
        %v1793 = vadd.f32 %v1646, %v1788
        %1794 = vmatprep.subr.mxu0 %v364
        %1795 = vmatpush1.msra.mxu0 %v363
        %1796 = vmatprep.subr.mxu0 %v362
        %1797 = vmatpush1.msra.mxu0 %v361
        %1798 = vmatprep.subr.mxu0 %v360
        %1799 = vmatpush1.msra.mxu0 %v359
        %1800 = vmatprep.subr.mxu0 %v358
        %1801 = vmatpush1.msra.mxu0 %v357
        %1802 = vmatprep.subr.mxu0 %v356
        %1803 = vmatpush1.msra.mxu0 %v355
        %1804 = vmatprep.subr.mxu0 %v354
        %1805 = vmatpush1.msra.mxu0 %v353
        %1806 = vmatprep.subr.mxu0 %v352
        %1807 = vmatpush1.msra.mxu0 %v351
        %1808 = vmatprep.subr.mxu0 %v350
        %1809 = vmatpush1.msra.mxu0 %v349
        %1810 = vmatprep.subr.mxu0 %v348
        %1811 = vmatpush1.msra.mxu0 %v347
        %1812 = vmatprep.subr.mxu0 %v346
        %1813 = vmatpush1.msra.mxu0 %v345
        %1814 = vmatprep.subr.mxu0 %v344
        %1815 = vmatpush1.msra.mxu0 %v343
        %1816 = vmatprep.subr.mxu0 %v342
        %1817 = vmatpush1.msra.mxu0 %v341
        %1818 = vmatprep.subr.mxu0 %v340
        %1819 = vmatpush1.msra.mxu0 %v339
        %1820 = vmatprep.subr.mxu0 %v338
        %1821 = vmatpush1.msra.mxu0 %v337
        %1822 = vmatprep.subr.mxu0 %v336
        %1823 = vmatpush1.msra.mxu0 %v335
        %1824 = vmatprep.subr.mxu0 %v334
        %1825 = vmatpush1.msra.mxu0 %v333
        %1826 = vmatprep.subr.mxu0 %v396
        %1827 = vmatpush2.msra.mxu0 %v395
        %1828 = vmatprep.subr.mxu0 %v394
        %1829 = vmatpush2.msra.mxu0 %v393
        %1830 = vmatprep.subr.mxu0 %v392
        %1831 = vmatpush2.msra.mxu0 %v391
        %1832 = vmatprep.subr.mxu0 %v390
        %1833 = vmatpush2.msra.mxu0 %v389
        %1834 = vmatprep.subr.mxu0 %v388
        %1835 = vmatpush2.msra.mxu0 %v387
        %1836 = vmatprep.subr.mxu0 %v386
        %1837 = vmatpush2.msra.mxu0 %v385
        %1838 = vmatprep.subr.mxu0 %v384
        %1839 = vmatpush2.msra.mxu0 %v383
        %1840 = vmatprep.subr.mxu0 %v382
        %1841 = vmatpush2.msra.mxu0 %v381
        %1842 = vmatprep.subr.mxu0 %v380
        %1843 = vmatpush2.msra.mxu0 %v379
        %1844 = vmatprep.subr.mxu0 %v378
        %1845 = vmatpush2.msra.mxu0 %v377
        %1846 = vmatprep.subr.mxu0 %v376
        %1847 = vmatpush2.msra.mxu0 %v375
        %1848 = vmatprep.subr.mxu0 %v374
        %1849 = vmatpush2.msra.mxu0 %v373
        %1850 = vmatprep.subr.mxu0 %v372
        %1851 = vmatpush2.msra.mxu0 %v371
        %1852 = vmatprep.subr.mxu0 %v370
        %1853 = vmatpush2.msra.mxu0 %v369
        %1854 = vmatprep.subr.mxu0 %v368
        %1855 = vmatpush2.msra.mxu0 %v367
        %1856 = vmatprep.subr.mxu0 %v366
        %1857 = vmatpush2.msra.mxu0 %v365
        %1858 = vmatprep.mubr.f32.mxu0 %v1791
        %1859 = vmatmul.mubr.f32.gmra.mxu0 %v1790
        %v1860 = vpop.f32.mrf.mxu0
        %v1861 = vadd.f32 0.0, %v1860
        %v1862 = vpop.f32.mrf.mxu0
        %v1863 = vadd.f32 0.0, %v1862
        %1864 = vmatprep.mubr.f32.mxu0 %v1793
        %1865 = vmatmul.mubr.f32.gmra.mxu0 %v1792
        %v1866 = vpop.f32.mrf.mxu0
        %v1867 = vadd.f32 0.0, %v1866
        %v1868 = vpop.f32.mrf.mxu0
        %v1869 = vadd.f32 0.0, %v1868
        %1870 = vdwg.mxu0
        %v1871 = vmul.f32 %v1790, %v1790
        %v1872 = vmul.f32 %v1791, %v1791
        %v1873 = vmul.f32 %v1792, %v1792
        %v1874 = vmul.f32 %v1793, %v1793
        %1875 = vmatprep.subr.mxu0 %v364
        %1876 = vmatpush1.msra.mxu0 %v363
        %1877 = vmatprep.subr.mxu0 %v362
        %1878 = vmatpush1.msra.mxu0 %v361
        %1879 = vmatprep.subr.mxu0 %v360
        %1880 = vmatpush1.msra.mxu0 %v359
        %1881 = vmatprep.subr.mxu0 %v358
        %1882 = vmatpush1.msra.mxu0 %v357
        %1883 = vmatprep.subr.mxu0 %v356
        %1884 = vmatpush1.msra.mxu0 %v355
        %1885 = vmatprep.subr.mxu0 %v354
        %1886 = vmatpush1.msra.mxu0 %v353
        %1887 = vmatprep.subr.mxu0 %v352
        %1888 = vmatpush1.msra.mxu0 %v351
        %1889 = vmatprep.subr.mxu0 %v350
        %1890 = vmatpush1.msra.mxu0 %v349
        %1891 = vmatprep.subr.mxu0 %v348
        %1892 = vmatpush1.msra.mxu0 %v347
        %1893 = vmatprep.subr.mxu0 %v346
        %1894 = vmatpush1.msra.mxu0 %v345
        %1895 = vmatprep.subr.mxu0 %v344
        %1896 = vmatpush1.msra.mxu0 %v343
        %1897 = vmatprep.subr.mxu0 %v342
        %1898 = vmatpush1.msra.mxu0 %v341
        %1899 = vmatprep.subr.mxu0 %v340
        %1900 = vmatpush1.msra.mxu0 %v339
        %1901 = vmatprep.subr.mxu0 %v338
        %1902 = vmatpush1.msra.mxu0 %v337
        %1903 = vmatprep.subr.mxu0 %v336
        %1904 = vmatpush1.msra.mxu0 %v335
        %1905 = vmatprep.subr.mxu0 %v334
        %1906 = vmatpush1.msra.mxu0 %v333
        %1907 = vmatprep.subr.mxu0 %v396
        %1908 = vmatpush2.msra.mxu0 %v395
        %1909 = vmatprep.subr.mxu0 %v394
        %1910 = vmatpush2.msra.mxu0 %v393
        %1911 = vmatprep.subr.mxu0 %v392
        %1912 = vmatpush2.msra.mxu0 %v391
        %1913 = vmatprep.subr.mxu0 %v390
        %1914 = vmatpush2.msra.mxu0 %v389
        %1915 = vmatprep.subr.mxu0 %v388
        %1916 = vmatpush2.msra.mxu0 %v387
        %1917 = vmatprep.subr.mxu0 %v386
        %1918 = vmatpush2.msra.mxu0 %v385
        %1919 = vmatprep.subr.mxu0 %v384
        %1920 = vmatpush2.msra.mxu0 %v383
        %1921 = vmatprep.subr.mxu0 %v382
        %1922 = vmatpush2.msra.mxu0 %v381
        %1923 = vmatprep.subr.mxu0 %v380
        %1924 = vmatpush2.msra.mxu0 %v379
        %1925 = vmatprep.subr.mxu0 %v378
        %1926 = vmatpush2.msra.mxu0 %v377
        %1927 = vmatprep.subr.mxu0 %v376
        %1928 = vmatpush2.msra.mxu0 %v375
        %1929 = vmatprep.subr.mxu0 %v374
        %1930 = vmatpush2.msra.mxu0 %v373
        %1931 = vmatprep.subr.mxu0 %v372
        %1932 = vmatpush2.msra.mxu0 %v371
        %1933 = vmatprep.subr.mxu0 %v370
        %1934 = vmatpush2.msra.mxu0 %v369
        %1935 = vmatprep.subr.mxu0 %v368
        %1936 = vmatpush2.msra.mxu0 %v367
        %1937 = vmatprep.subr.mxu0 %v366
        %1938 = vmatpush2.msra.mxu0 %v365
        %1939 = vmatprep.mubr.f32.mxu0 %v1872
        %1940 = vmatmul.mubr.f32.gmra.mxu0 %v1871
        %v1941 = vpop.f32.mrf.mxu0
        %v1942 = vadd.f32 0.0, %v1941
        %v1943 = vpop.f32.mrf.mxu0
        %v1944 = vadd.f32 0.0, %v1943
        %1945 = vmatprep.mubr.f32.mxu0 %v1874
        %1946 = vmatmul.mubr.f32.gmra.mxu0 %v1873
        %v1947 = vpop.f32.mrf.mxu0
        %v1948 = vadd.f32 0.0, %v1947
        %v1949 = vpop.f32.mrf.mxu0
        %v1950 = vadd.f32 0.0, %v1949
        %1951 = vdwg.mxu0
        %v1952 = vadd.f32 %v1861, %v1867
        %v1953 = vrot.slane %v1952, 4
        %v1954 = vadd.f32 %v1952, %v1953
        %v1955 = vrot.slane %v1954, 2
        %v1956 = vadd.f32 %v1954, %v1955
        %v1957 = vrot.slane %v1956, 1
        %v1958 = vadd.f32 %v1956, %v1957
        %v1959 = vadd.f32 %v1863, %v1869
        %v1960 = vrot.slane %v1959, 4
        %v1961 = vadd.f32 %v1959, %v1960
        %v1962 = vrot.slane %v1961, 2
        %v1963 = vadd.f32 %v1961, %v1962
        %v1964 = vrot.slane %v1963, 1
        %v1965 = vadd.f32 %v1963, %v1964
        %v1966 = vmul.f32 %v1958, 0.00390625
        %v1967 = vmul.f32 %v1965, 0.00390625
        %v1968 = vadd.f32 %v1942, %v1948
        %v1969 = vrot.slane %v1968, 4
        %v1970 = vadd.f32 %v1968, %v1969
        %v1971 = vrot.slane %v1970, 2
        %v1972 = vadd.f32 %v1970, %v1971
        %v1973 = vrot.slane %v1972, 1
        %v1974 = vadd.f32 %v1972, %v1973
        %v1975 = vadd.f32 %v1944, %v1950
        %v1976 = vrot.slane %v1975, 4
        %v1977 = vadd.f32 %v1975, %v1976
        %v1978 = vrot.slane %v1977, 2
        %v1979 = vadd.f32 %v1977, %v1978
        %v1980 = vrot.slane %v1979, 1
        %v1981 = vadd.f32 %v1979, %v1980
        %v1982 = vmul.f32 %v1974, 0.00390625
        %v1983 = vmul.f32 %v1981, 0.00390625
        %v1984 = vmul.f32 %v1966, %v1966
        %v1985 = vmul.f32 %v1967, %v1967
        %v1986 = vsub.f32 %v1982, %v1984
        %v1987 = vsub.f32 %v1983, %v1985
        %v1988 = vmax.f32 %v1986, 0.0
        %v1989 = vmax.f32 %v1987, 0.0
        %v1990 = vsub.f32 %v1790, %v1966
        %v1991 = vsub.f32 %v1791, %v1967
        %v1992 = vsub.f32 %v1792, %v1966
        %v1993 = vsub.f32 %v1793, %v1967
        %v1994 = vadd.f32 %v1988, 1e-05
        %v1995 = vadd.f32 %v1989, 1e-05
        %v1996 = vrsqrt.pop %v1994
        %v1997 = vrsqrt.pop %v1995
        %v1998 = vmul.f32 %v1990, %v1996
        %v1999 = vmul.f32 %v1991, %v1997
        %v2000 = vmul.f32 %v1992, %v1996
        %v2001 = vmul.f32 %v1993, %v1997
        %v2002 = vmul.f32 %v329, 2.0
        %v2003 = vmul.f32 %v330, 2.0
        %v2004 = vmul.f32 %v331, 2.0
        %v2005 = vmul.f32 %v332, 2.0
        %v2006 = vadd.f32 %v1998, %v2002
        %v2007 = vadd.f32 %v1999, %v2003
        %v2008 = vadd.f32 %v2000, %v2004
        %v2009 = vadd.f32 %v2001, %v2005
        %v2010 = vstv %s402
        %v2011 = vadd.f32 %v2006, %v2010
        %v2012 = vadd.f32 %v2007, %v2010
        %v2013 = vadd.f32 %v2008, %v2010
        %v2014 = vadd.f32 %v2009, %v2010
        %2015 = vst [vmem:[%s328] sm:$0xff] %v2011
        %2016 = vst [vmem:[%s328 + $0x8] sm:$0xff] %v2012
        %2017 = vst [vmem:[%s328 + $0x10] sm:$0xff] %v2013
        %2018 = vst [vmem:[%s328 + $0x18] sm:$0xff] %v2014
        %s2019 = sand.u32 %s165, 1
        %s2020 = scalar_lea.sflag [#allocation5], %s2019
        %s2021 = sand.u32 %s165, 1
        %s2022 = smul.addr %s2021, 32
        %s2023 = scalar_lea.vmem [#allocation12], %s2022
        // Predicated region
        $region65: #{tpu_custom_call.1} parent=43 // pred_check
          %p2024 = pneg %p175
        $region66: #{tpu_custom_call.1} parent=43 // pred_check_branch
          %2026 = sbr.rel (%p2024) target = $region68
        $region67: #{tpu_custom_call.1} parent=43 // pred_region
          %s2028 = ssub.s32 512, 512
          %2029 = vsyncadd %s2020, %s2028
          %s2030 = smul.addr %s26, 4
          %s2031 = smul.addr %s2030, 128
          %s2032 = scalar_lea.hbm %s6, %s2031
          %s2033 = sshll.u32 %s2023, 4
          %s2034 = int_to_ptr.vmem [resolvable:$true] %s2033
          %2039 = dma.vmem_to_hbm [thread:$0]  %s2034, 512, %s2032, %s2020, 256, 256, 16
        $region68: #{tpu_custom_call.1} parent=43 // pred_fallthru
          _
      $region44: #{tpu_custom_call.1} parent=5 // pred_fallthru
        _
      %p2040 = scmp.le.s32.totalorder 2, %s21
      // Predicated region
      $region69: #{tpu_custom_call.1} parent=5 // pred_check
        %p2041 = pneg %p2040
      $region70: #{tpu_custom_call.1} parent=5 // pred_check_branch
        %2043 = sbr.rel (%p2041) target = $region72
      $region71: #{tpu_custom_call.1} parent=5 // pred_region
        %s2044 = ssub.s32 %s21, 2
        // Predicated region
        $region73: #{tpu_custom_call.1} parent=71 // pred_check
          %p2045 = pneg %p181
        $region74: #{tpu_custom_call.1} parent=71 // pred_check_branch
          %2047 = sbr.rel (%p2045) target = $region76
        $region75: #{tpu_custom_call.1} parent=71 // pred_region
          %s2048 = sand.u32 %s166, 1
          %s2049 = scalar_lea.sflag [#allocation5], %s2048
          %s2050 = sand.u32 %s166, 1
          %s2051 = smul.addr %s2050, 32
          %s2052 = scalar_lea.vmem [#allocation12], %s2051
          %2053 = dma.done %s2049, 512
        $region76: #{tpu_custom_call.1} parent=71 // pred_fallthru
          _
      $region72: #{tpu_custom_call.1} parent=5 // pred_fallthru
        _
    $region6: #{tpu_custom_call.1} parent=1 // loop_footer
      %s25 = sadd.s32 1, %s21
    $region7: #{tpu_custom_call.1} parent=1 // loop_footer_branch
      %20 = sbr.rel target = $region3
    $region8: #{tpu_custom_call.1} parent=1 // loop_exit
      _
    %2054 = vsyncpa [#allocation4], 1
    %s2055 = scalar_lea.sflag [#allocation4], 1
    %2056 = vsyncpa %s2055, 1
    %2057 = vsyncpa [#allocation7], 1
    %2058 = vsyncpa [#allocation10], 1
    %2059 = vsyncpa [#allocation5], 1
    %s2060 = scalar_lea.sflag [#allocation5], 1
    %2061 = vsyncpa %s2060, 1

</llo_original>
